<compile_context>
chip_gen: v7x
topology: tpu7x:2x2x1
jax: 0.10.0
libtpu: 0.0.40
codegen_flags: <defaults>
</compile_context>

<pallas_src>
import functools

import numpy as np
import jax
import jax.numpy as jnp
from jax import lax
from jax.experimental import pallas as pl
from jax.experimental.pallas import tpu as pltpu


# -----------------------------------------------------------------------------
# Fused Pallas kernel: conv1 -> conv2 -> adaptive-avg-pool(5,5) -> linear
# One image per grid step; everything stays in VMEM.
# -----------------------------------------------------------------------------
def _cnn_fused_kernel(x_ref, w1_ref, w2_ref, pool_ref, wl_ref, o_ref,
                      *, width, l1, l2, cout1, cout2, ncls):
    x = x_ref[...]                                        # (Cin, L0) full-width flat layout

    # conv1: 9 shifted-slice matmuls; output lane-dense along spatial (l1 lanes)
    h1 = jnp.zeros((cout1, l1), jnp.float32)
    for t in range(9):
        dy, dx = t // 3, t % 3
        off = dy * width + dx
        h1 = h1 + jnp.dot(w1_ref[t], x[:, off:off + l1],
                          preferred_element_type=jnp.float32)

    # conv2: same trick on the (still full-width) conv1 output
    h2 = jnp.zeros((cout2, l2), jnp.float32)
    for t in range(9):
        dy, dx = t // 3, t % 3
        off = dy * width + dx
        h2 = h2 + jnp.dot(w2_ref[t], h1[:, off:off + l2],
                          preferred_element_type=jnp.float32)

    # AdaptiveAvgPool2d((5,5)): single dot against the precomputed averaging matrix
    pooled = jnp.dot(h2, pool_ref[...], preferred_element_type=jnp.float32)   # (cout2, 25)

    # Linear(200 -> 10), no bias: sum of per-channel (1,25)x(25,10) dots
    out = jnp.zeros((1, ncls), jnp.float32)
    for c in range(cout2):
        out = out + jnp.dot(pooled[c:c + 1, :], wl_ref[c],
                            preferred_element_type=jnp.float32)
    o_ref[...] = out


# -----------------------------------------------------------------------------
# Host-side one-time weight/constant preparation
# -----------------------------------------------------------------------------
def _adaptive_pool_matrix(in_h, in_w, row_stride, out_h, out_w):
    """(in_h*row_stride, out_h*out_w) matrix reproducing torch AdaptiveAvgPool2d windows
    on a full-width flattened input (row index = h*row_stride + w)."""
    mat = np.zeros((in_h * row_stride, out_h * out_w), dtype=np.float32)
    for oh in range(out_h):
        h0 = (oh * in_h) // out_h
        h1 = -((-(oh + 1) * in_h) // out_h)
        for ow in range(out_w):
            w0 = (ow * in_w) // out_w
            w1 = -((-(ow + 1) * in_w) // out_w)
            cnt = (h1 - h0) * (w1 - w0)
            for h in range(h0, h1):
                for w in range(w0, w1):
                    mat[h * row_stride + w, oh * out_w + ow] = 1.0 / cnt
    return jnp.asarray(mat)


def prepare_params(w_conv1, w_conv2, w_linear, in_h, in_w):
    """Re-layout PyTorch-style weights once for the fused kernel."""
    cout1, cin = w_conv1.shape[0], w_conv1.shape[1]
    cout2 = w_conv2.shape[0]
    ncls = w_linear.shape[0]
    h2, w2 = in_h - 4, in_w - 4
    # (Cout, Cin, kh, kw) -> (kh*kw, Cout, Cin): one (Cout, Cin) matrix per tap
    w1_taps = jnp.transpose(w_conv1, (2, 3, 0, 1)).reshape(9, cout1, cin)
    w2_taps = jnp.transpose(w_conv2, (2, 3, 0, 1)).reshape(9, cout2, cout1)
    # pooling matrix on the full-width (row stride = in_w) conv2 output layout
    pool_mat = _adaptive_pool_matrix(h2, w2, in_w, 5, 5)            # (h2*in_w, 25)
    # Linear weight (ncls, cout2*25) -> (cout2, 25, ncls): per-channel (25, ncls)
    wl_chan = jnp.transpose(w_linear.reshape(ncls, cout2, 25), (1, 2, 0))
    return w1_taps, w2_taps, pool_mat, wl_chan


# -----------------------------------------------------------------------------
# Forward pass (jit this)
# -----------------------------------------------------------------------------
def cnn_forward(x, w1_taps, w2_taps, pool_mat, wl_chan):
    B, cin, H, W = x.shape
    h2s, w2s = H - 4, W - 4
    cout1 = w1_taps.shape[1]
    cout2 = w2_taps.shape[1]
    ncls = wl_chan.shape[-1]

    # full-width flattened lengths (row stride = W all the way down);
    # each layer keeps 2*W + 2 extra trailing (junk) columns so every tap slice is in-bounds.
    l2 = h2s * W
    l1 = l2 + 2 * W + 2
    l0 = l1 + 2 * W + 2

    x_flat = x.reshape(B, cin, H * W)
    x_flat = jnp.pad(x_flat, ((0, 0), (0, 0), (0, l0 - H * W)))

    kernel = functools.partial(_cnn_fused_kernel, width=W, l1=l1, l2=l2,
                               cout1=cout1, cout2=cout2, ncls=ncls)

    out = pl.pallas_call(
        kernel,
        out_shape=jax.ShapeDtypeStruct((B, 1, ncls), jnp.float32),
        grid=(B,),
        in_specs=[
            pl.BlockSpec((None, cin, l0), lambda b: (b, 0, 0)),      # per-image input tile
            pl.BlockSpec((9, cout1, cin), lambda b: (0, 0, 0)),      # conv1 tap weights
            pl.BlockSpec((9, cout2, cout1), lambda b: (0, 0, 0)),    # conv2 tap weights
            pl.BlockSpec(pool_mat.shape, lambda b: (0, 0)),          # pooling matrix
            pl.BlockSpec(wl_chan.shape, lambda b: (0, 0, 0)),        # per-channel linear weights
        ],
        out_specs=pl.BlockSpec((None, 1, ncls), lambda b: (b, 0, 0)),
        compiler_params=pltpu.CompilerParams(
            dimension_semantics=("parallel",),   # batch axis shards over v7x's 2 TCs
        ),
    )(x_flat, w1_taps, w2_taps, pool_mat, wl_chan)
    return out.reshape(B, ncls)


# -----------------------------------------------------------------------------
# Pure-JAX reference (matches the PyTorch module) + param init
# -----------------------------------------------------------------------------
def cnn_reference(x, w_conv1, w_conv2, w_linear):
    dn = ("NCHW", "OIHW", "NCHW")
    y = lax.conv_general_dilated(x, w_conv1, (1, 1), "VALID", dimension_numbers=dn)
    y = lax.conv_general_dilated(y, w_conv2, (1, 1), "VALID", dimension_numbers=dn)
    B, C, H, W = y.shape
    cols = []
    for oh in range(5):
        h0, h1 = (oh * H) // 5, -((-(oh + 1) * H) // 5)
        for ow in range(5):
            w0, w1 = (ow * W) // 5, -((-(ow + 1) * W) // 5)
            cols.append(jnp.mean(y[:, :, h0:h1, w0:w1], axis=(2, 3)))
    pooled = jnp.stack(cols, axis=-1)                 # (B, C, 25), idx = oh*5+ow
    return pooled.reshape(B, -1) @ w_linear.T


def init_params(key):
    k1, k2, k3 = jax.random.split(key, 3)
    w_conv1 = 0.1 * jax.random.normal(k1, (8, 3, 3, 3), dtype=jnp.float32)
    w_conv2 = 0.1 * jax.random.normal(k2, (8, 8, 3, 3), dtype=jnp.float32)
    w_linear = 0.1 * jax.random.normal(k3, (10, 200), dtype=jnp.float32)
    return w_conv1, w_conv2, w_linear


if __name__ == "__main__":
    key = jax.random.PRNGKey(0)
    kx, kp = jax.random.split(key)
    # NCHW input: batch=2, channels=3, spatial=16 -> conv->14 -> conv->12 -> pool->5
    x = jax.random.normal(kx, (2, 3, 16, 16), dtype=jnp.float32)
    w_conv1, w_conv2, w_linear = init_params(kp)

    prepped = prepare_params(w_conv1, w_conv2, w_linear, 16, 16)   # one-time host prep
    fwd = jax.jit(cnn_forward)

    out = jax.block_until_ready(fwd(x, *prepped))
    assert out.shape == (2, 10) and out.dtype == jnp.float32

    ref = cnn_reference(x, w_conv1, w_conv2, w_linear)
    np.testing.assert_allclose(np.asarray(out), np.asarray(ref), rtol=1e-4, atol=1e-4)
    print("KERNEL_OK")
</pallas_src>

<mosaic_0001>
module attributes {stable_mosaic.version = 11 : i64} {
  func.func @_cnn_fused_kernel(%arg0: i32, %arg1: memref<1x3x260xf32, #tpu.memory_space<vmem>>, %arg2: memref<9x8x3xf32, #tpu.memory_space<vmem>>, %arg3: memref<9x8x8xf32, #tpu.memory_space<vmem>>, %arg4: memref<192x25xf32, #tpu.memory_space<vmem>>, %arg5: memref<8x25x10xf32, #tpu.memory_space<vmem>>, %arg6: memref<1x1x10xf32, #tpu.memory_space<vmem>>) attributes {dimension_semantics = [#tpu.dimension_semantics<parallel>], iteration_bounds = array<i64: 2>, scalar_prefetch = 0 : i64, scratch_operands = 0 : i64, tpu.core_type = #tpu.core_type<tc>, window_params = [{transform_indices = @transform_0, window_bounds = array<i64: 1, 3, 260>}, {pipeline_mode = #tpu.pipeline_mode<synchronous>, transform_indices = @transform_1, window_bounds = array<i64: 9, 8, 3>}, {pipeline_mode = #tpu.pipeline_mode<synchronous>, transform_indices = @transform_2, window_bounds = array<i64: 9, 8, 8>}, {pipeline_mode = #tpu.pipeline_mode<synchronous>, transform_indices = @transform_3, window_bounds = array<i64: 192, 25>}, {pipeline_mode = #tpu.pipeline_mode<synchronous>, transform_indices = @transform_4, window_bounds = array<i64: 8, 25, 10>}, {transform_indices = @transform_5, window_bounds = array<i64: 1, 1, 10>}]} {
    %c0 = arith.constant 0 : index
    %c0_0 = arith.constant 0 : index
    %c0_1 = arith.constant 0 : index
    %0 = vector.load %arg1[%c0, %c0_0, %c0_1] : memref<1x3x260xf32, #tpu.memory_space<vmem>>, vector<1x3x260xf32>
    %1 = vector.shape_cast %0 : vector<1x3x260xf32> to vector<3x260xf32>
    %cst = arith.constant 0.000000e+00 : f32
    %2 = vector.broadcast %cst : f32 to vector<8x226xf32>
    %c0_2 = arith.constant 0 : index
    %c0_3 = arith.constant 0 : index
    %c0_4 = arith.constant 0 : index
    %3 = vector.load %arg2[%c0_2, %c0_3, %c0_4] : memref<9x8x3xf32, #tpu.memory_space<vmem>>, vector<1x8x3xf32>
    %4 = vector.shape_cast %3 : vector<1x8x3xf32> to vector<8x3xf32>
    %5 = vector.extract_strided_slice %1 {offsets = [0, 0], sizes = [3, 226], strides = [1, 1]} : vector<3x260xf32> to vector<3x226xf32>
    %cst_5 = arith.constant dense<0.000000e+00> : vector<8x226xf32>
    %6 = tpu.matmul %4, %5, %cst_5 {dimension_numbers = #tpu.dot_dimension_numbers<[1], [0], [0], [1], [0, 0, 1, 1], [], []>} : vector<8x3xf32>, vector<3x226xf32>, vector<8x226xf32> -> vector<8x226xf32>
    %7 = arith.addf %2, %6 : vector<8x226xf32>
    %c1 = arith.constant 1 : index
    %c0_6 = arith.constant 0 : index
    %c0_7 = arith.constant 0 : index
    %8 = vector.load %arg2[%c1, %c0_6, %c0_7] : memref<9x8x3xf32, #tpu.memory_space<vmem>>, vector<1x8x3xf32>
    %9 = vector.shape_cast %8 : vector<1x8x3xf32> to vector<8x3xf32>
    %10 = vector.extract_strided_slice %1 {offsets = [0, 1], sizes = [3, 226], strides = [1, 1]} : vector<3x260xf32> to vector<3x226xf32>
    %cst_8 = arith.constant dense<0.000000e+00> : vector<8x226xf32>
    %11 = tpu.matmul %9, %10, %cst_8 {dimension_numbers = #tpu.dot_dimension_numbers<[1], [0], [0], [1], [0, 0, 1, 1], [], []>} : vector<8x3xf32>, vector<3x226xf32>, vector<8x226xf32> -> vector<8x226xf32>
    %12 = arith.addf %7, %11 : vector<8x226xf32>
    %c2 = arith.constant 2 : index
    %c0_9 = arith.constant 0 : index
    %c0_10 = arith.constant 0 : index
    %13 = vector.load %arg2[%c2, %c0_9, %c0_10] : memref<9x8x3xf32, #tpu.memory_space<vmem>>, vector<1x8x3xf32>
    %14 = vector.shape_cast %13 : vector<1x8x3xf32> to vector<8x3xf32>
    %15 = vector.extract_strided_slice %1 {offsets = [0, 2], sizes = [3, 226], strides = [1, 1]} : vector<3x260xf32> to vector<3x226xf32>
    %cst_11 = arith.constant dense<0.000000e+00> : vector<8x226xf32>
    %16 = tpu.matmul %14, %15, %cst_11 {dimension_numbers = #tpu.dot_dimension_numbers<[1], [0], [0], [1], [0, 0, 1, 1], [], []>} : vector<8x3xf32>, vector<3x226xf32>, vector<8x226xf32> -> vector<8x226xf32>
    %17 = arith.addf %12, %16 : vector<8x226xf32>
    %c3 = arith.constant 3 : index
    %c0_12 = arith.constant 0 : index
    %c0_13 = arith.constant 0 : index
    %18 = vector.load %arg2[%c3, %c0_12, %c0_13] : memref<9x8x3xf32, #tpu.memory_space<vmem>>, vector<1x8x3xf32>
    %19 = vector.shape_cast %18 : vector<1x8x3xf32> to vector<8x3xf32>
    %20 = vector.extract_strided_slice %1 {offsets = [0, 16], sizes = [3, 226], strides = [1, 1]} : vector<3x260xf32> to vector<3x226xf32>
    %cst_14 = arith.constant dense<0.000000e+00> : vector<8x226xf32>
    %21 = tpu.matmul %19, %20, %cst_14 {dimension_numbers = #tpu.dot_dimension_numbers<[1], [0], [0], [1], [0, 0, 1, 1], [], []>} : vector<8x3xf32>, vector<3x226xf32>, vector<8x226xf32> -> vector<8x226xf32>
    %22 = arith.addf %17, %21 : vector<8x226xf32>
    %c4 = arith.constant 4 : index
    %c0_15 = arith.constant 0 : index
    %c0_16 = arith.constant 0 : index
    %23 = vector.load %arg2[%c4, %c0_15, %c0_16] : memref<9x8x3xf32, #tpu.memory_space<vmem>>, vector<1x8x3xf32>
    %24 = vector.shape_cast %23 : vector<1x8x3xf32> to vector<8x3xf32>
    %25 = vector.extract_strided_slice %1 {offsets = [0, 17], sizes = [3, 226], strides = [1, 1]} : vector<3x260xf32> to vector<3x226xf32>
    %cst_17 = arith.constant dense<0.000000e+00> : vector<8x226xf32>
    %26 = tpu.matmul %24, %25, %cst_17 {dimension_numbers = #tpu.dot_dimension_numbers<[1], [0], [0], [1], [0, 0, 1, 1], [], []>} : vector<8x3xf32>, vector<3x226xf32>, vector<8x226xf32> -> vector<8x226xf32>
    %27 = arith.addf %22, %26 : vector<8x226xf32>
    %c5 = arith.constant 5 : index
    %c0_18 = arith.constant 0 : index
    %c0_19 = arith.constant 0 : index
    %28 = vector.load %arg2[%c5, %c0_18, %c0_19] : memref<9x8x3xf32, #tpu.memory_space<vmem>>, vector<1x8x3xf32>
    %29 = vector.shape_cast %28 : vector<1x8x3xf32> to vector<8x3xf32>
    %30 = vector.extract_strided_slice %1 {offsets = [0, 18], sizes = [3, 226], strides = [1, 1]} : vector<3x260xf32> to vector<3x226xf32>
    %cst_20 = arith.constant dense<0.000000e+00> : vector<8x226xf32>
    %31 = tpu.matmul %29, %30, %cst_20 {dimension_numbers = #tpu.dot_dimension_numbers<[1], [0], [0], [1], [0, 0, 1, 1], [], []>} : vector<8x3xf32>, vector<3x226xf32>, vector<8x226xf32> -> vector<8x226xf32>
    %32 = arith.addf %27, %31 : vector<8x226xf32>
    %c6 = arith.constant 6 : index
    %c0_21 = arith.constant 0 : index
    %c0_22 = arith.constant 0 : index
    %33 = vector.load %arg2[%c6, %c0_21, %c0_22] : memref<9x8x3xf32, #tpu.memory_space<vmem>>, vector<1x8x3xf32>
    %34 = vector.shape_cast %33 : vector<1x8x3xf32> to vector<8x3xf32>
    %35 = vector.extract_strided_slice %1 {offsets = [0, 32], sizes = [3, 226], strides = [1, 1]} : vector<3x260xf32> to vector<3x226xf32>
    %cst_23 = arith.constant dense<0.000000e+00> : vector<8x226xf32>
    %36 = tpu.matmul %34, %35, %cst_23 {dimension_numbers = #tpu.dot_dimension_numbers<[1], [0], [0], [1], [0, 0, 1, 1], [], []>} : vector<8x3xf32>, vector<3x226xf32>, vector<8x226xf32> -> vector<8x226xf32>
    %37 = arith.addf %32, %36 : vector<8x226xf32>
    %c7 = arith.constant 7 : index
    %c0_24 = arith.constant 0 : index
    %c0_25 = arith.constant 0 : index
    %38 = vector.load %arg2[%c7, %c0_24, %c0_25] : memref<9x8x3xf32, #tpu.memory_space<vmem>>, vector<1x8x3xf32>
    %39 = vector.shape_cast %38 : vector<1x8x3xf32> to vector<8x3xf32>
    %40 = vector.extract_strided_slice %1 {offsets = [0, 33], sizes = [3, 226], strides = [1, 1]} : vector<3x260xf32> to vector<3x226xf32>
    %cst_26 = arith.constant dense<0.000000e+00> : vector<8x226xf32>
    %41 = tpu.matmul %39, %40, %cst_26 {dimension_numbers = #tpu.dot_dimension_numbers<[1], [0], [0], [1], [0, 0, 1, 1], [], []>} : vector<8x3xf32>, vector<3x226xf32>, vector<8x226xf32> -> vector<8x226xf32>
    %42 = arith.addf %37, %41 : vector<8x226xf32>
    %c8 = arith.constant 8 : index
    %c0_27 = arith.constant 0 : index
    %c0_28 = arith.constant 0 : index
    %43 = vector.load %arg2[%c8, %c0_27, %c0_28] : memref<9x8x3xf32, #tpu.memory_space<vmem>>, vector<1x8x3xf32>
    %44 = vector.shape_cast %43 : vector<1x8x3xf32> to vector<8x3xf32>
    %45 = vector.extract_strided_slice %1 {offsets = [0, 34], sizes = [3, 226], strides = [1, 1]} : vector<3x260xf32> to vector<3x226xf32>
    %cst_29 = arith.constant dense<0.000000e+00> : vector<8x226xf32>
    %46 = tpu.matmul %44, %45, %cst_29 {dimension_numbers = #tpu.dot_dimension_numbers<[1], [0], [0], [1], [0, 0, 1, 1], [], []>} : vector<8x3xf32>, vector<3x226xf32>, vector<8x226xf32> -> vector<8x226xf32>
    %47 = arith.addf %42, %46 : vector<8x226xf32>
    %cst_30 = arith.constant 0.000000e+00 : f32
    %48 = vector.broadcast %cst_30 : f32 to vector<8x192xf32>
    %c0_31 = arith.constant 0 : index
    %c0_32 = arith.constant 0 : index
    %c0_33 = arith.constant 0 : index
    %49 = vector.load %arg3[%c0_31, %c0_32, %c0_33] : memref<9x8x8xf32, #tpu.memory_space<vmem>>, vector<1x8x8xf32>
    %50 = vector.shape_cast %49 : vector<1x8x8xf32> to vector<8x8xf32>
    %51 = vector.extract_strided_slice %47 {offsets = [0, 0], sizes = [8, 192], strides = [1, 1]} : vector<8x226xf32> to vector<8x192xf32>
    %cst_34 = arith.constant dense<0.000000e+00> : vector<8x192xf32>
    %52 = tpu.matmul %50, %51, %cst_34 {dimension_numbers = #tpu.dot_dimension_numbers<[1], [0], [0], [1], [0, 0, 1, 1], [], []>} : vector<8x8xf32>, vector<8x192xf32>, vector<8x192xf32> -> vector<8x192xf32>
    %53 = arith.addf %48, %52 : vector<8x192xf32>
    %c1_35 = arith.constant 1 : index
    %c0_36 = arith.constant 0 : index
    %c0_37 = arith.constant 0 : index
    %54 = vector.load %arg3[%c1_35, %c0_36, %c0_37] : memref<9x8x8xf32, #tpu.memory_space<vmem>>, vector<1x8x8xf32>
    %55 = vector.shape_cast %54 : vector<1x8x8xf32> to vector<8x8xf32>
    %56 = vector.extract_strided_slice %47 {offsets = [0, 1], sizes = [8, 192], strides = [1, 1]} : vector<8x226xf32> to vector<8x192xf32>
    %cst_38 = arith.constant dense<0.000000e+00> : vector<8x192xf32>
    %57 = tpu.matmul %55, %56, %cst_38 {dimension_numbers = #tpu.dot_dimension_numbers<[1], [0], [0], [1], [0, 0, 1, 1], [], []>} : vector<8x8xf32>, vector<8x192xf32>, vector<8x192xf32> -> vector<8x192xf32>
    %58 = arith.addf %53, %57 : vector<8x192xf32>
    %c2_39 = arith.constant 2 : index
    %c0_40 = arith.constant 0 : index
    %c0_41 = arith.constant 0 : index
    %59 = vector.load %arg3[%c2_39, %c0_40, %c0_41] : memref<9x8x8xf32, #tpu.memory_space<vmem>>, vector<1x8x8xf32>
    %60 = vector.shape_cast %59 : vector<1x8x8xf32> to vector<8x8xf32>
    %61 = vector.extract_strided_slice %47 {offsets = [0, 2], sizes = [8, 192], strides = [1, 1]} : vector<8x226xf32> to vector<8x192xf32>
    %cst_42 = arith.constant dense<0.000000e+00> : vector<8x192xf32>
    %62 = tpu.matmul %60, %61, %cst_42 {dimension_numbers = #tpu.dot_dimension_numbers<[1], [0], [0], [1], [0, 0, 1, 1], [], []>} : vector<8x8xf32>, vector<8x192xf32>, vector<8x192xf32> -> vector<8x192xf32>
    %63 = arith.addf %58, %62 : vector<8x192xf32>
    %c3_43 = arith.constant 3 : index
    %c0_44 = arith.constant 0 : index
    %c0_45 = arith.constant 0 : index
    %64 = vector.load %arg3[%c3_43, %c0_44, %c0_45] : memref<9x8x8xf32, #tpu.memory_space<vmem>>, vector<1x8x8xf32>
    %65 = vector.shape_cast %64 : vector<1x8x8xf32> to vector<8x8xf32>
    %66 = vector.extract_strided_slice %47 {offsets = [0, 16], sizes = [8, 192], strides = [1, 1]} : vector<8x226xf32> to vector<8x192xf32>
    %cst_46 = arith.constant dense<0.000000e+00> : vector<8x192xf32>
    %67 = tpu.matmul %65, %66, %cst_46 {dimension_numbers = #tpu.dot_dimension_numbers<[1], [0], [0], [1], [0, 0, 1, 1], [], []>} : vector<8x8xf32>, vector<8x192xf32>, vector<8x192xf32> -> vector<8x192xf32>
    %68 = arith.addf %63, %67 : vector<8x192xf32>
    %c4_47 = arith.constant 4 : index
    %c0_48 = arith.constant 0 : index
    %c0_49 = arith.constant 0 : index
    %69 = vector.load %arg3[%c4_47, %c0_48, %c0_49] : memref<9x8x8xf32, #tpu.memory_space<vmem>>, vector<1x8x8xf32>
    %70 = vector.shape_cast %69 : vector<1x8x8xf32> to vector<8x8xf32>
    %71 = vector.extract_strided_slice %47 {offsets = [0, 17], sizes = [8, 192], strides = [1, 1]} : vector<8x226xf32> to vector<8x192xf32>
    %cst_50 = arith.constant dense<0.000000e+00> : vector<8x192xf32>
    %72 = tpu.matmul %70, %71, %cst_50 {dimension_numbers = #tpu.dot_dimension_numbers<[1], [0], [0], [1], [0, 0, 1, 1], [], []>} : vector<8x8xf32>, vector<8x192xf32>, vector<8x192xf32> -> vector<8x192xf32>
    %73 = arith.addf %68, %72 : vector<8x192xf32>
    %c5_51 = arith.constant 5 : index
    %c0_52 = arith.constant 0 : index
    %c0_53 = arith.constant 0 : index
    %74 = vector.load %arg3[%c5_51, %c0_52, %c0_53] : memref<9x8x8xf32, #tpu.memory_space<vmem>>, vector<1x8x8xf32>
    %75 = vector.shape_cast %74 : vector<1x8x8xf32> to vector<8x8xf32>
    %76 = vector.extract_strided_slice %47 {offsets = [0, 18], sizes = [8, 192], strides = [1, 1]} : vector<8x226xf32> to vector<8x192xf32>
    %cst_54 = arith.constant dense<0.000000e+00> : vector<8x192xf32>
    %77 = tpu.matmul %75, %76, %cst_54 {dimension_numbers = #tpu.dot_dimension_numbers<[1], [0], [0], [1], [0, 0, 1, 1], [], []>} : vector<8x8xf32>, vector<8x192xf32>, vector<8x192xf32> -> vector<8x192xf32>
    %78 = arith.addf %73, %77 : vector<8x192xf32>
    %c6_55 = arith.constant 6 : index
    %c0_56 = arith.constant 0 : index
    %c0_57 = arith.constant 0 : index
    %79 = vector.load %arg3[%c6_55, %c0_56, %c0_57] : memref<9x8x8xf32, #tpu.memory_space<vmem>>, vector<1x8x8xf32>
    %80 = vector.shape_cast %79 : vector<1x8x8xf32> to vector<8x8xf32>
    %81 = vector.extract_strided_slice %47 {offsets = [0, 32], sizes = [8, 192], strides = [1, 1]} : vector<8x226xf32> to vector<8x192xf32>
    %cst_58 = arith.constant dense<0.000000e+00> : vector<8x192xf32>
    %82 = tpu.matmul %80, %81, %cst_58 {dimension_numbers = #tpu.dot_dimension_numbers<[1], [0], [0], [1], [0, 0, 1, 1], [], []>} : vector<8x8xf32>, vector<8x192xf32>, vector<8x192xf32> -> vector<8x192xf32>
    %83 = arith.addf %78, %82 : vector<8x192xf32>
    %c7_59 = arith.constant 7 : index
    %c0_60 = arith.constant 0 : index
    %c0_61 = arith.constant 0 : index
    %84 = vector.load %arg3[%c7_59, %c0_60, %c0_61] : memref<9x8x8xf32, #tpu.memory_space<vmem>>, vector<1x8x8xf32>
    %85 = vector.shape_cast %84 : vector<1x8x8xf32> to vector<8x8xf32>
    %86 = vector.extract_strided_slice %47 {offsets = [0, 33], sizes = [8, 192], strides = [1, 1]} : vector<8x226xf32> to vector<8x192xf32>
    %cst_62 = arith.constant dense<0.000000e+00> : vector<8x192xf32>
    %87 = tpu.matmul %85, %86, %cst_62 {dimension_numbers = #tpu.dot_dimension_numbers<[1], [0], [0], [1], [0, 0, 1, 1], [], []>} : vector<8x8xf32>, vector<8x192xf32>, vector<8x192xf32> -> vector<8x192xf32>
    %88 = arith.addf %83, %87 : vector<8x192xf32>
    %c8_63 = arith.constant 8 : index
    %c0_64 = arith.constant 0 : index
    %c0_65 = arith.constant 0 : index
    %89 = vector.load %arg3[%c8_63, %c0_64, %c0_65] : memref<9x8x8xf32, #tpu.memory_space<vmem>>, vector<1x8x8xf32>
    %90 = vector.shape_cast %89 : vector<1x8x8xf32> to vector<8x8xf32>
    %91 = vector.extract_strided_slice %47 {offsets = [0, 34], sizes = [8, 192], strides = [1, 1]} : vector<8x226xf32> to vector<8x192xf32>
    %cst_66 = arith.constant dense<0.000000e+00> : vector<8x192xf32>
    %92 = tpu.matmul %90, %91, %cst_66 {dimension_numbers = #tpu.dot_dimension_numbers<[1], [0], [0], [1], [0, 0, 1, 1], [], []>} : vector<8x8xf32>, vector<8x192xf32>, vector<8x192xf32> -> vector<8x192xf32>
    %93 = arith.addf %88, %92 : vector<8x192xf32>
    %c0_67 = arith.constant 0 : index
    %c0_68 = arith.constant 0 : index
    %94 = vector.load %arg4[%c0_67, %c0_68] : memref<192x25xf32, #tpu.memory_space<vmem>>, vector<192x25xf32>
    %cst_69 = arith.constant dense<0.000000e+00> : vector<8x25xf32>
    %95 = tpu.matmul %93, %94, %cst_69 {dimension_numbers = #tpu.dot_dimension_numbers<[1], [0], [0], [1], [0, 0, 1, 1], [], []>} : vector<8x192xf32>, vector<192x25xf32>, vector<8x25xf32> -> vector<8x25xf32>
    %cst_70 = arith.constant 0.000000e+00 : f32
    %96 = vector.broadcast %cst_70 : f32 to vector<1x10xf32>
    %97 = vector.extract_strided_slice %95 {offsets = [0, 0], sizes = [1, 25], strides = [1, 1]} : vector<8x25xf32> to vector<1x25xf32>
    %c0_71 = arith.constant 0 : index
    %c0_72 = arith.constant 0 : index
    %c0_73 = arith.constant 0 : index
    %98 = vector.load %arg5[%c0_71, %c0_72, %c0_73] : memref<8x25x10xf32, #tpu.memory_space<vmem>>, vector<1x25x10xf32>
    %99 = vector.shape_cast %98 : vector<1x25x10xf32> to vector<25x10xf32>
    %cst_74 = arith.constant dense<0.000000e+00> : vector<1x10xf32>
    %100 = tpu.matmul %97, %99, %cst_74 {dimension_numbers = #tpu.dot_dimension_numbers<[1], [0], [0], [1], [0, 0, 1, 1], [], []>} : vector<1x25xf32>, vector<25x10xf32>, vector<1x10xf32> -> vector<1x10xf32>
    %101 = arith.addf %96, %100 : vector<1x10xf32>
    %102 = vector.extract_strided_slice %95 {offsets = [1, 0], sizes = [1, 25], strides = [1, 1]} : vector<8x25xf32> to vector<1x25xf32>
    %c1_75 = arith.constant 1 : index
    %c0_76 = arith.constant 0 : index
    %c0_77 = arith.constant 0 : index
    %103 = vector.load %arg5[%c1_75, %c0_76, %c0_77] : memref<8x25x10xf32, #tpu.memory_space<vmem>>, vector<1x25x10xf32>
    %104 = vector.shape_cast %103 : vector<1x25x10xf32> to vector<25x10xf32>
    %cst_78 = arith.constant dense<0.000000e+00> : vector<1x10xf32>
    %105 = tpu.matmul %102, %104, %cst_78 {dimension_numbers = #tpu.dot_dimension_numbers<[1], [0], [0], [1], [0, 0, 1, 1], [], []>} : vector<1x25xf32>, vector<25x10xf32>, vector<1x10xf32> -> vector<1x10xf32>
    %106 = arith.addf %101, %105 : vector<1x10xf32>
    %107 = vector.extract_strided_slice %95 {offsets = [2, 0], sizes = [1, 25], strides = [1, 1]} : vector<8x25xf32> to vector<1x25xf32>
    %c2_79 = arith.constant 2 : index
    %c0_80 = arith.constant 0 : index
    %c0_81 = arith.constant 0 : index
    %108 = vector.load %arg5[%c2_79, %c0_80, %c0_81] : memref<8x25x10xf32, #tpu.memory_space<vmem>>, vector<1x25x10xf32>
    %109 = vector.shape_cast %108 : vector<1x25x10xf32> to vector<25x10xf32>
    %cst_82 = arith.constant dense<0.000000e+00> : vector<1x10xf32>
    %110 = tpu.matmul %107, %109, %cst_82 {dimension_numbers = #tpu.dot_dimension_numbers<[1], [0], [0], [1], [0, 0, 1, 1], [], []>} : vector<1x25xf32>, vector<25x10xf32>, vector<1x10xf32> -> vector<1x10xf32>
    %111 = arith.addf %106, %110 : vector<1x10xf32>
    %112 = vector.extract_strided_slice %95 {offsets = [3, 0], sizes = [1, 25], strides = [1, 1]} : vector<8x25xf32> to vector<1x25xf32>
    %c3_83 = arith.constant 3 : index
    %c0_84 = arith.constant 0 : index
    %c0_85 = arith.constant 0 : index
    %113 = vector.load %arg5[%c3_83, %c0_84, %c0_85] : memref<8x25x10xf32, #tpu.memory_space<vmem>>, vector<1x25x10xf32>
    %114 = vector.shape_cast %113 : vector<1x25x10xf32> to vector<25x10xf32>
    %cst_86 = arith.constant dense<0.000000e+00> : vector<1x10xf32>
    %115 = tpu.matmul %112, %114, %cst_86 {dimension_numbers = #tpu.dot_dimension_numbers<[1], [0], [0], [1], [0, 0, 1, 1], [], []>} : vector<1x25xf32>, vector<25x10xf32>, vector<1x10xf32> -> vector<1x10xf32>
    %116 = arith.addf %111, %115 : vector<1x10xf32>
    %117 = vector.extract_strided_slice %95 {offsets = [4, 0], sizes = [1, 25], strides = [1, 1]} : vector<8x25xf32> to vector<1x25xf32>
    %c4_87 = arith.constant 4 : index
    %c0_88 = arith.constant 0 : index
    %c0_89 = arith.constant 0 : index
    %118 = vector.load %arg5[%c4_87, %c0_88, %c0_89] : memref<8x25x10xf32, #tpu.memory_space<vmem>>, vector<1x25x10xf32>
    %119 = vector.shape_cast %118 : vector<1x25x10xf32> to vector<25x10xf32>
    %cst_90 = arith.constant dense<0.000000e+00> : vector<1x10xf32>
    %120 = tpu.matmul %117, %119, %cst_90 {dimension_numbers = #tpu.dot_dimension_numbers<[1], [0], [0], [1], [0, 0, 1, 1], [], []>} : vector<1x25xf32>, vector<25x10xf32>, vector<1x10xf32> -> vector<1x10xf32>
    %121 = arith.addf %116, %120 : vector<1x10xf32>
    %122 = vector.extract_strided_slice %95 {offsets = [5, 0], sizes = [1, 25], strides = [1, 1]} : vector<8x25xf32> to vector<1x25xf32>
    %c5_91 = arith.constant 5 : index
    %c0_92 = arith.constant 0 : index
    %c0_93 = arith.constant 0 : index
    %123 = vector.load %arg5[%c5_91, %c0_92, %c0_93] : memref<8x25x10xf32, #tpu.memory_space<vmem>>, vector<1x25x10xf32>
    %124 = vector.shape_cast %123 : vector<1x25x10xf32> to vector<25x10xf32>
    %cst_94 = arith.constant dense<0.000000e+00> : vector<1x10xf32>
    %125 = tpu.matmul %122, %124, %cst_94 {dimension_numbers = #tpu.dot_dimension_numbers<[1], [0], [0], [1], [0, 0, 1, 1], [], []>} : vector<1x25xf32>, vector<25x10xf32>, vector<1x10xf32> -> vector<1x10xf32>
    %126 = arith.addf %121, %125 : vector<1x10xf32>
    %127 = vector.extract_strided_slice %95 {offsets = [6, 0], sizes = [1, 25], strides = [1, 1]} : vector<8x25xf32> to vector<1x25xf32>
    %c6_95 = arith.constant 6 : index
    %c0_96 = arith.constant 0 : index
    %c0_97 = arith.constant 0 : index
    %128 = vector.load %arg5[%c6_95, %c0_96, %c0_97] : memref<8x25x10xf32, #tpu.memory_space<vmem>>, vector<1x25x10xf32>
    %129 = vector.shape_cast %128 : vector<1x25x10xf32> to vector<25x10xf32>
    %cst_98 = arith.constant dense<0.000000e+00> : vector<1x10xf32>
    %130 = tpu.matmul %127, %129, %cst_98 {dimension_numbers = #tpu.dot_dimension_numbers<[1], [0], [0], [1], [0, 0, 1, 1], [], []>} : vector<1x25xf32>, vector<25x10xf32>, vector<1x10xf32> -> vector<1x10xf32>
    %131 = arith.addf %126, %130 : vector<1x10xf32>
    %132 = vector.extract_strided_slice %95 {offsets = [7, 0], sizes = [1, 25], strides = [1, 1]} : vector<8x25xf32> to vector<1x25xf32>
    %c7_99 = arith.constant 7 : index
    %c0_100 = arith.constant 0 : index
    %c0_101 = arith.constant 0 : index
    %133 = vector.load %arg5[%c7_99, %c0_100, %c0_101] : memref<8x25x10xf32, #tpu.memory_space<vmem>>, vector<1x25x10xf32>
    %134 = vector.shape_cast %133 : vector<1x25x10xf32> to vector<25x10xf32>
    %cst_102 = arith.constant dense<0.000000e+00> : vector<1x10xf32>
    %135 = tpu.matmul %132, %134, %cst_102 {dimension_numbers = #tpu.dot_dimension_numbers<[1], [0], [0], [1], [0, 0, 1, 1], [], []>} : vector<1x25xf32>, vector<25x10xf32>, vector<1x10xf32> -> vector<1x10xf32>
    %136 = arith.addf %131, %135 : vector<1x10xf32>
    %c0_103 = arith.constant 0 : index
    %c0_104 = arith.constant 0 : index
    %c0_105 = arith.constant 0 : index
    %137 = vector.load %arg6[%c0_103, %c0_104, %c0_105] : memref<1x1x10xf32, #tpu.memory_space<vmem>>, vector<1x1x10xf32>
    %138 = vector.shape_cast %137 : vector<1x1x10xf32> to vector<1x10xf32>
    %139 = vector.shape_cast %136 : vector<1x10xf32> to vector<1x1x10xf32>
    tpu.vector_store %arg6[%c0_103, %c0_104, %c0_105], %139 {strides = array<i32>} : memref<1x1x10xf32, #tpu.memory_space<vmem>>, vector<1x1x10xf32>,
    return
  }
  func.func @transform_0(%arg0: i32) -> (i32, i32, i32) {
    %c0_i32 = arith.constant 0 : i32
    %c0_i32_0 = arith.constant 0 : i32
    %c0_i32_1 = arith.constant 0 : i32
    return %arg0, %c0_i32, %c0_i32_0 : i32, i32, i32
  }
  func.func @transform_1(%arg0: i32) -> (i32, i32, i32) {
    %c0_i32 = arith.constant 0 : i32
    %c0_i32_0 = arith.constant 0 : i32
    %c0_i32_1 = arith.constant 0 : i32
    %c0_i32_2 = arith.constant 0 : i32
    return %c0_i32, %c0_i32_0, %c0_i32_1 : i32, i32, i32
  }
  func.func @transform_2(%arg0: i32) -> (i32, i32, i32) {
    %c0_i32 = arith.constant 0 : i32
    %c0_i32_0 = arith.constant 0 : i32
    %c0_i32_1 = arith.constant 0 : i32
    %c0_i32_2 = arith.constant 0 : i32
    return %c0_i32, %c0_i32_0, %c0_i32_1 : i32, i32, i32
  }
  func.func @transform_3(%arg0: i32) -> (i32, i32) {
    %c0_i32 = arith.constant 0 : i32
    %c0_i32_0 = arith.constant 0 : i32
    %c0_i32_1 = arith.constant 0 : i32
    return %c0_i32, %c0_i32_0 : i32, i32
  }
  func.func @transform_4(%arg0: i32) -> (i32, i32, i32) {
    %c0_i32 = arith.constant 0 : i32
    %c0_i32_0 = arith.constant 0 : i32
    %c0_i32_1 = arith.constant 0 : i32
    %c0_i32_2 = arith.constant 0 : i32
    return %c0_i32, %c0_i32_0, %c0_i32_1 : i32, i32, i32
  }
  func.func @transform_5(%arg0: i32) -> (i32, i32, i32) {
    %c0_i32 = arith.constant 0 : i32
    %c0_i32_0 = arith.constant 0 : i32
    %c0_i32_1 = arith.constant 0 : i32
    return %arg0, %c0_i32, %c0_i32_0 : i32, i32, i32
  }
}

</mosaic_0001>

<llo_original>
// kernel: cnn_forward.1
$region0: #{cnn_forward.1}
  #allocation0 [shape = 'u32[]', space=smem, size = 0x4, offset = 0x4, fixed_abs, tag = 'smem constant byte address 0x4 - core index']
  #allocation1 [shape = 'u32[144,128]{1,0:T(1,128)}', space=vmem, size = 0x12000, scoped, tag = 'internal scratch']
  %s0 = inlined_call_operand.vmem [shape: f32[2,3,260], index: 0, kind: input, shape index: {}]
  %s1 = inlined_call_operand.vmem [shape: f32[9,8,3], index: 1, kind: input, shape index: {}]
  %s2 = inlined_call_operand.vmem [shape: f32[9,8,8], index: 2, kind: input, shape index: {}]
  %s3 = inlined_call_operand.vmem [shape: f32[192,25], index: 3, kind: input, shape index: {}]
  %s4 = inlined_call_operand.vmem [shape: f32[8,25,10], index: 4, kind: input, shape index: {}]
  %s5 = inlined_call_operand.hbm [shape: f32[2,1,10], index: 5, kind: output, shape index: {}]
  %s6 = sld [smem:[#allocation0]]
  $region53: #{cnn_forward.1} parent=0
    _
  %s8 = ssub.s32 1, %s6
  %s9 = scalar_select 0, %s8, %s6
  $region1: #{cnn_forward.1} parent=0
    #allocation2 [shape = 'u8[1024]{0}', space=vmem, size = 0x400, scoped, tag = 'output window, operand 0']
    #allocation3 [shape = 's32[2]{0}', space=sflag, size = 0x8, scoped, tag = 'scoped memory for cnn_forward.1']
    %10 = vsyncpa [#allocation3], 0
    %s11 = scalar_lea.sflag [#allocation3], 1
    %12 = vsyncpa %s11, 0
    loop: start=0, step=1, limit=4
    $region2: #{cnn_forward.1} parent=1 // loop_pre_header
      _
    $region3: #{cnn_forward.1} parent=1 // loop_header
      %s14 = sphi 0, %s18
      %p15 = scmp.ge.s32.totalorder %s14, 4
      %s24 = sphi 0, %s26
      %s27 = sphi 0, %s24
      %s28 = sphi 0, %s27
      %s44 = sphi 0, %s28
      %s48 = sphi 0, %s48
      %s50 = sphi 0, %s48
      %s51 = sphi 0, %s50
      %s65 = sphi 0, %s51
      %s69 = sphi 0, %s69
      %s71 = sphi 0, %s69
      %s72 = sphi 0, %s71
      %s86 = sphi 0, %s72
      %s90 = sphi 0, %s90
      %s92 = sphi 0, %s90
      %s93 = sphi 0, %s92
      %s107 = sphi 0, %s93
      %s111 = sphi 0, %s111
      %s113 = sphi 0, %s111
      %s114 = sphi 0, %s113
      %s128 = sphi 0, %s114
      %s134 = sphi 0, %s136
      %s137 = sphi 0, %s134
      %s138 = sphi 0, %s137
      %s154 = sphi 0, %s138
    $region4: #{cnn_forward.1} parent=1 // loop_header_branch
      %17 = sbr.rel (%p15) target = $region8
    $region5: #{cnn_forward.1} parent=1 // loop_body
      %s19 = ssub.s32 %s14, 1
      %s20 = ssub.s32 %s14, 2
      %s21 = sadd.s32 %s14, 1
      %s22 = ssub.s32 %s14, %s21
      %p23 = scmp.eq.s32.totalorder %s22, 0
      %s25 = sadd.s32 %s24, 1
      %s26 = scalar_select %p23, %s24, %s25
      %p29 = pneg %p23
      %p30 = scmp.eq.s32.totalorder %s14, 1
      %p31 = por %p29, %p30
      %p32 = scmp.ne.s32.totalorder %s24, %s27
      %p33 = scmp.eq.s32.totalorder %s14, 0
      %p34 = por %p32, %p33
      %p35 = scmp.ne.s32.totalorder %s24, %s27
      %p36 = scmp.eq.s32.totalorder %s19, 1
      %p37 = por %p35, %p36
      %p38 = scmp.ne.s32.totalorder %s27, %s28
      %p39 = scmp.eq.s32.totalorder %s19, 0
      %p40 = por %p38, %p39
      %p41 = scmp.ne.s32.totalorder %s27, %s28
      %p42 = scmp.eq.s32.totalorder %s20, 1
      %p43 = por %p41, %p42
      %p45 = scmp.ne.s32.totalorder %s28, %s44
      %p46 = scmp.eq.s32.totalorder %s20, 0
      %p47 = por %p45, %p46
      %s49 = sadd.s32 %s48, 1
      %p52 = scmp.eq.s32.totalorder %s14, 1
      %p53 = scmp.ne.s32.totalorder %s48, %s50
      %p54 = scmp.eq.s32.totalorder %s14, 0
      %p55 = por %p53, %p54
      %p56 = scmp.ne.s32.totalorder %s48, %s50
      %p57 = scmp.eq.s32.totalorder %s19, 1
      %p58 = por %p56, %p57
      %p59 = scmp.ne.s32.totalorder %s50, %s51
      %p60 = scmp.eq.s32.totalorder %s19, 0
      %p61 = por %p59, %p60
      %p62 = scmp.ne.s32.totalorder %s50, %s51
      %p63 = scmp.eq.s32.totalorder %s20, 1
      %p64 = por %p62, %p63
      %p66 = scmp.ne.s32.totalorder %s51, %s65
      %p67 = scmp.eq.s32.totalorder %s20, 0
      %p68 = por %p66, %p67
      %s70 = sadd.s32 %s69, 1
      %p73 = scmp.eq.s32.totalorder %s14, 1
      %p74 = scmp.ne.s32.totalorder %s69, %s71
      %p75 = scmp.eq.s32.totalorder %s14, 0
      %p76 = por %p74, %p75
      %p77 = scmp.ne.s32.totalorder %s69, %s71
      %p78 = scmp.eq.s32.totalorder %s19, 1
      %p79 = por %p77, %p78
      %p80 = scmp.ne.s32.totalorder %s71, %s72
      %p81 = scmp.eq.s32.totalorder %s19, 0
      %p82 = por %p80, %p81
      %p83 = scmp.ne.s32.totalorder %s71, %s72
      %p84 = scmp.eq.s32.totalorder %s20, 1
      %p85 = por %p83, %p84
      %p87 = scmp.ne.s32.totalorder %s72, %s86
      %p88 = scmp.eq.s32.totalorder %s20, 0
      %p89 = por %p87, %p88
      %s91 = sadd.s32 %s90, 1
      %p94 = scmp.eq.s32.totalorder %s14, 1
      %p95 = scmp.ne.s32.totalorder %s90, %s92
      %p96 = scmp.eq.s32.totalorder %s14, 0
      %p97 = por %p95, %p96
      %p98 = scmp.ne.s32.totalorder %s90, %s92
      %p99 = scmp.eq.s32.totalorder %s19, 1
      %p100 = por %p98, %p99
      %p101 = scmp.ne.s32.totalorder %s92, %s93
      %p102 = scmp.eq.s32.totalorder %s19, 0
      %p103 = por %p101, %p102
      %p104 = scmp.ne.s32.totalorder %s92, %s93
      %p105 = scmp.eq.s32.totalorder %s20, 1
      %p106 = por %p104, %p105
      %p108 = scmp.ne.s32.totalorder %s93, %s107
      %p109 = scmp.eq.s32.totalorder %s20, 0
      %p110 = por %p108, %p109
      %s112 = sadd.s32 %s111, 1
      %p115 = scmp.eq.s32.totalorder %s14, 1
      %p116 = scmp.ne.s32.totalorder %s111, %s113
      %p117 = scmp.eq.s32.totalorder %s14, 0
      %p118 = por %p116, %p117
      %p119 = scmp.ne.s32.totalorder %s111, %s113
      %p120 = scmp.eq.s32.totalorder %s19, 1
      %p121 = por %p119, %p120
      %p122 = scmp.ne.s32.totalorder %s113, %s114
      %p123 = scmp.eq.s32.totalorder %s19, 0
      %p124 = por %p122, %p123
      %p125 = scmp.ne.s32.totalorder %s113, %s114
      %p126 = scmp.eq.s32.totalorder %s20, 1
      %p127 = por %p125, %p126
      %p129 = scmp.ne.s32.totalorder %s114, %s128
      %p130 = scmp.eq.s32.totalorder %s20, 0
      %p131 = por %p129, %p130
      %s132 = ssub.s32 %s14, %s21
      %p133 = scmp.eq.s32.totalorder %s132, 0
      %s135 = sadd.s32 %s134, 1
      %s136 = scalar_select %p133, %s134, %s135
      %p139 = pneg %p133
      %p140 = scmp.eq.s32.totalorder %s14, 1
      %p141 = por %p139, %p140
      %p142 = scmp.ne.s32.totalorder %s134, %s137
      %p143 = scmp.eq.s32.totalorder %s14, 0
      %p144 = por %p142, %p143
      %p145 = scmp.ne.s32.totalorder %s134, %s137
      %p146 = scmp.eq.s32.totalorder %s19, 1
      %p147 = por %p145, %p146
      %p148 = scmp.ne.s32.totalorder %s137, %s138
      %p149 = scmp.eq.s32.totalorder %s19, 0
      %p150 = por %p148, %p149
      %p151 = scmp.ne.s32.totalorder %s137, %s138
      %p152 = scmp.eq.s32.totalorder %s20, 1
      %p153 = por %p151, %p152
      %p155 = scmp.ne.s32.totalorder %s138, %s154
      %p156 = scmp.eq.s32.totalorder %s20, 0
      %p157 = por %p155, %p156
      %p158 = scmp.le.s32.totalorder 1, %s14
      %p159 = scmp.lt.s32.totalorder %s14, 3
      %p160 = pnand %p158, %p159
      %p161 = pneg %p160
      // Predicated region
      $region9: #{cnn_forward.1} parent=5 // pred_check
        _
      $region10: #{cnn_forward.1} parent=5 // pred_check_branch
        %163 = sbr.rel (%p160) target = $region12
      $region11: #{cnn_forward.1} parent=5 // pred_region
        %s164 = ssub.s32 %s14, 1
        // Predicated region
        $region13: #{cnn_forward.1} parent=11 // pred_check
          %p165 = pneg %p61
        $region14: #{cnn_forward.1} parent=11 // pred_check_branch
          %167 = sbr.rel (%p165) target = $region16
        $region15: #{cnn_forward.1} parent=11 // pred_region
          _
        $region16: #{cnn_forward.1} parent=11 // pred_fallthru
          _
        // Predicated region
        $region17: #{cnn_forward.1} parent=11 // pred_check
          %p168 = pneg %p82
        $region18: #{cnn_forward.1} parent=11 // pred_check_branch
          %170 = sbr.rel (%p168) target = $region20
        $region19: #{cnn_forward.1} parent=11 // pred_region
          _
        $region20: #{cnn_forward.1} parent=11 // pred_fallthru
          _
        // Predicated region
        $region21: #{cnn_forward.1} parent=11 // pred_check
          %p171 = pneg %p103
        $region22: #{cnn_forward.1} parent=11 // pred_check_branch
          %173 = sbr.rel (%p171) target = $region24
        $region23: #{cnn_forward.1} parent=11 // pred_region
          _
        $region24: #{cnn_forward.1} parent=11 // pred_fallthru
          _
        // Predicated region
        $region25: #{cnn_forward.1} parent=11 // pred_check
          %p174 = pneg %p124
        $region26: #{cnn_forward.1} parent=11 // pred_check_branch
          %176 = sbr.rel (%p174) target = $region28
        $region27: #{cnn_forward.1} parent=11 // pred_region
          _
        $region28: #{cnn_forward.1} parent=11 // pred_fallthru
          _
      $region12: #{cnn_forward.1} parent=5 // pred_fallthru
        _
      %p177 = scmp.lt.s32.totalorder %s14, 2
      // Predicated region
      $region29: #{cnn_forward.1} parent=5 // pred_check
        %p178 = pneg %p177
      $region30: #{cnn_forward.1} parent=5 // pred_check_branch
        %180 = sbr.rel (%p178) target = $region32
      $region31: #{cnn_forward.1} parent=5 // pred_region
        // Predicated region
        $region33: #{cnn_forward.1} parent=31 // pred_check
          %p181 = pneg %p34
        $region34: #{cnn_forward.1} parent=31 // pred_check_branch
          %183 = sbr.rel (%p181) target = $region36
        $region35: #{cnn_forward.1} parent=31 // pred_region
          %p184 = scmp.lt.s32.totalorder %s14, 1
          %s185 = scalar_select %p184, %s14, 1
          %s186 = smul.addr %s185, 3
          %s187 = smul.addr %s186, 4
          %s188 = scalar_lea.vmem %s0, %s187
        $region36: #{cnn_forward.1} parent=31 // pred_fallthru
          _
      $region32: #{cnn_forward.1} parent=5 // pred_fallthru
        _
      %p189 = scmp.le.s32.totalorder 1, %s14
      %p190 = scmp.lt.s32.totalorder %s14, 3
      %p191 = pnand %p189, %p190
      %p192 = pneg %p191
      // Predicated region
      $region37: #{cnn_forward.1} parent=5 // pred_check
        _
      $region38: #{cnn_forward.1} parent=5 // pred_check_branch
        %194 = sbr.rel (%p191) target = $region40
      $region39: #{cnn_forward.1} parent=5 // pred_region
        %s195 = ssub.s32 %s14, 1
        %p196 = scmp.lt.s32.totalorder %s19, 1
        %s197 = scalar_select %p196, %s19, 1
        %s198 = smul.addr %s197, 3
        %s199 = smul.addr %s198, 4
        %s200 = scalar_lea.vmem %s0, %s199
        %p201 = pneg %p40
        %p202 = pneg %p37
        %p203 = pneg %p61
        %p204 = pneg %p58
        %p205 = pneg %p82
        %p206 = pneg %p79
        %p207 = pneg %p103
        %p208 = pneg %p100
        %p209 = pneg %p124
        %p210 = pneg %p121
        %p211 = pneg %p150
        %p212 = pneg %p147
        %s213 = sand.u32 %s137, 1
        %s214 = scalar_lea.sflag [#allocation3], %s213
        %s215 = sand.u32 %s137, 1
        %s216 = scalar_lea.vmem [#allocation2], %s215
        %p217 = scmp.lt.s32.totalorder %s19, 1
        %s218 = scalar_select %p217, %s19, 1
        %s219 = smul.addr %s218, 3
        %s220 = smul.addr %s219, 4
        %s221 = scalar_lea.vmem %s0, %s220
        %v222 = vld [vmem:[%s221] sm:$0x77]
        %v223 = vld [vmem:[%s221 + $0x8] sm:$0x7]
        %v224 = vld [vmem:[%s1] sm:$0xff]
        %s225 = scalar_lea.vmem %s1, 8
        %v226 = vld [vmem:[%s225] sm:$0xff]
        %v228 = vcombine.high %v222, %v222
        %229 = vrot.lane.b32.xlu0 %v222, 127
        %v230 = vpop.permute.xlu0 %229
        %231 = vrot.lane.b32.xlu0 %v228, 127
        %v232 = vpop.permute.xlu0 %231
        %vm233 = vcmask 1039360
        %v234 = vsel %vm233, %v230, %v232
        %vm235 = vcmask 23552
        %v237 = vsel %vm235, %v226, 0
        %vm239 = vcmask 1042432
        %v240 = vsel %vm239, %v234, 0
        %v242 = vsel %vm239, %v232, 0
        %244 = vmatprep.subr.mxu0 %v242
        %245 = vmatpush1.msra.mxu0 %v240
        %246 = vmatprep.subr.mxu0 0.0
        %247 = vmatpush1.msra.mxu0 0.0
        %248 = vmatprep.subr.mxu0 0.0
        %249 = vmatpush1.msra.mxu0 0.0
        %250 = vmatprep.subr.mxu0 0.0
        %251 = vmatpush1.msra.mxu0 0.0
        %252 = vmatprep.subr.mxu0 0.0
        %253 = vmatpush1.msra.mxu0 0.0
        %254 = vmatprep.subr.mxu0 0.0
        %255 = vmatpush1.msra.mxu0 0.0
        %256 = vmatprep.subr.mxu0 0.0
        %257 = vmatpush1.msra.mxu0 0.0
        %258 = vmatprep.subr.mxu0 0.0
        %259 = vmatpush1.msra.mxu0 0.0
        %260 = vmatprep.subr.mxu0 0.0
        %261 = vmatpush1.msra.mxu0 0.0
        %262 = vmatprep.subr.mxu0 0.0
        %263 = vmatpush1.msra.mxu0 0.0
        %264 = vmatprep.subr.mxu0 0.0
        %265 = vmatpush1.msra.mxu0 0.0
        %266 = vmatprep.subr.mxu0 0.0
        %267 = vmatpush1.msra.mxu0 0.0
        %268 = vmatprep.subr.mxu0 0.0
        %269 = vmatpush1.msra.mxu0 0.0
        %270 = vmatprep.subr.mxu0 0.0
        %271 = vmatpush1.msra.mxu0 0.0
        %272 = vmatprep.subr.mxu0 0.0
        %273 = vmatpush1.msra.mxu0 0.0
        %274 = vmatprep.subr.mxu0 0.0
        %275 = vmatpush1.msra.mxu0 0.0
        %276 = vmatprep.subr.mxu0 0.0
        %277 = vmatpush1.msra.mxu0 0.0
        %278 = vmatprep.subr.mxu0 0.0
        %279 = vmatpush1.msra.mxu0 0.0
        %280 = vmatprep.subr.mxu0 0.0
        %281 = vmatpush1.msra.mxu0 0.0
        %282 = vmatprep.subr.mxu0 0.0
        %283 = vmatpush1.msra.mxu0 0.0
        %284 = vmatprep.subr.mxu0 0.0
        %285 = vmatpush1.msra.mxu0 0.0
        %286 = vmatprep.subr.mxu0 0.0
        %287 = vmatpush1.msra.mxu0 0.0
        %288 = vmatprep.subr.mxu0 0.0
        %289 = vmatpush1.msra.mxu0 0.0
        %290 = vmatprep.subr.mxu0 0.0
        %291 = vmatpush1.msra.mxu0 0.0
        %292 = vmatprep.subr.mxu0 0.0
        %293 = vmatpush1.msra.mxu0 0.0
        %294 = vmatprep.subr.mxu0 0.0
        %295 = vmatpush1.msra.mxu0 0.0
        %296 = vmatprep.subr.mxu0 0.0
        %297 = vmatpush1.msra.mxu0 0.0
        %298 = vmatprep.subr.mxu0 0.0
        %299 = vmatpush1.msra.mxu0 0.0
        %300 = vmatprep.subr.mxu0 0.0
        %301 = vmatpush1.msra.mxu0 0.0
        %302 = vmatprep.subr.mxu0 0.0
        %303 = vmatpush1.msra.mxu0 0.0
        %304 = vmatprep.subr.mxu0 0.0
        %305 = vmatpush1.msra.mxu0 0.0
        %306 = vmatprep.subr.mxu0 0.0
        %307 = vmatpush1.msra.mxu0 0.0
        %308 = vmatprep.mubr.f32.mxu0 0.0
        %309 = vmatmul.mubr.f32.gmra.mrb[0].mxu0 %v237
        %v310 = vpop.f32.mrb[0].mxu0
        %v311 = vadd.f32 0.0, %v310
        %v312 = vpop.f32.mrb[0].mxu0
        %v313 = vadd.f32 0.0, %v312
        %314 = vdwg.mxu0
        %v316 = vsel %vm235, %v224, 0
        %v318 = vsel %vm239, %v222, 0
        %v320 = vsel %vm239, %v228, 0
        %322 = vmatprep.subr.mxu0 %v320
        %323 = vmatpush1.msra.mxu0 %v318
        %324 = vmatprep.subr.mxu0 0.0
        %325 = vmatpush1.msra.mxu0 0.0
        %326 = vmatprep.subr.mxu0 0.0
        %327 = vmatpush1.msra.mxu0 0.0
        %328 = vmatprep.subr.mxu0 0.0
        %329 = vmatpush1.msra.mxu0 0.0
        %330 = vmatprep.subr.mxu0 0.0
        %331 = vmatpush1.msra.mxu0 0.0
        %332 = vmatprep.subr.mxu0 0.0
        %333 = vmatpush1.msra.mxu0 0.0
        %334 = vmatprep.subr.mxu0 0.0
        %335 = vmatpush1.msra.mxu0 0.0
        %336 = vmatprep.subr.mxu0 0.0
        %337 = vmatpush1.msra.mxu0 0.0
        %338 = vmatprep.subr.mxu0 0.0
        %339 = vmatpush1.msra.mxu0 0.0
        %340 = vmatprep.subr.mxu0 0.0
        %341 = vmatpush1.msra.mxu0 0.0
        %342 = vmatprep.subr.mxu0 0.0
        %343 = vmatpush1.msra.mxu0 0.0
        %344 = vmatprep.subr.mxu0 0.0
        %345 = vmatpush1.msra.mxu0 0.0
        %346 = vmatprep.subr.mxu0 0.0
        %347 = vmatpush1.msra.mxu0 0.0
        %348 = vmatprep.subr.mxu0 0.0
        %349 = vmatpush1.msra.mxu0 0.0
        %350 = vmatprep.subr.mxu0 0.0
        %351 = vmatpush1.msra.mxu0 0.0
        %352 = vmatprep.subr.mxu0 0.0
        %353 = vmatpush1.msra.mxu0 0.0
        %354 = vmatprep.subr.mxu0 0.0
        %355 = vmatpush1.msra.mxu0 0.0
        %356 = vmatprep.subr.mxu0 0.0
        %357 = vmatpush1.msra.mxu0 0.0
        %358 = vmatprep.subr.mxu0 0.0
        %359 = vmatpush1.msra.mxu0 0.0
        %360 = vmatprep.subr.mxu0 0.0
        %361 = vmatpush1.msra.mxu0 0.0
        %362 = vmatprep.subr.mxu0 0.0
        %363 = vmatpush1.msra.mxu0 0.0
        %364 = vmatprep.subr.mxu0 0.0
        %365 = vmatpush1.msra.mxu0 0.0
        %366 = vmatprep.subr.mxu0 0.0
        %367 = vmatpush1.msra.mxu0 0.0
        %368 = vmatprep.subr.mxu0 0.0
        %369 = vmatpush1.msra.mxu0 0.0
        %370 = vmatprep.subr.mxu0 0.0
        %371 = vmatpush1.msra.mxu0 0.0
        %372 = vmatprep.subr.mxu0 0.0
        %373 = vmatpush1.msra.mxu0 0.0
        %374 = vmatprep.subr.mxu0 0.0
        %375 = vmatpush1.msra.mxu0 0.0
        %376 = vmatprep.subr.mxu0 0.0
        %377 = vmatpush1.msra.mxu0 0.0
        %378 = vmatprep.subr.mxu0 0.0
        %379 = vmatpush1.msra.mxu0 0.0
        %380 = vmatprep.subr.mxu0 0.0
        %381 = vmatpush1.msra.mxu0 0.0
        %382 = vmatprep.subr.mxu0 0.0
        %383 = vmatpush1.msra.mxu0 0.0
        %384 = vmatprep.subr.mxu0 0.0
        %385 = vmatpush1.msra.mxu0 0.0
        %386 = vmatprep.mubr.f32.mxu0 0.0
        %387 = vmatmul.mubr.f32.gmra.mrb[0].mxu0 %v316
        %v388 = vpop.f32.mrb[0].mxu0
        %v389 = vadd.f32 %v311, %v388
        %v390 = vpop.f32.mrb[0].mxu0
        %v391 = vadd.f32 %v313, %v390
        %392 = vdwg.mxu0
        %s393 = scalar_lea.vmem %s1, 16
        %v394 = vld [vmem:[%s393] sm:$0xff]
        %395 = vrot.lane.b32.xlu0 %v222, 126
        %v396 = vpop.permute.xlu0 %395
        %397 = vrot.lane.b32.xlu0 %v228, 126
        %v398 = vpop.permute.xlu0 %397
        %vm399 = vcmask 1031168
        %v400 = vsel %vm399, %v396, %v398
        %v402 = vsel %vm235, %v394, 0
        %v404 = vsel %vm239, %v400, 0
        %v406 = vsel %vm239, %v398, 0
        %408 = vmatprep.subr.mxu0 %v406
        %409 = vmatpush1.msra.mxu0 %v404
        %410 = vmatprep.subr.mxu0 0.0
        %411 = vmatpush1.msra.mxu0 0.0
        %412 = vmatprep.subr.mxu0 0.0
        %413 = vmatpush1.msra.mxu0 0.0
        %414 = vmatprep.subr.mxu0 0.0
        %415 = vmatpush1.msra.mxu0 0.0
        %416 = vmatprep.subr.mxu0 0.0
        %417 = vmatpush1.msra.mxu0 0.0
        %418 = vmatprep.subr.mxu0 0.0
        %419 = vmatpush1.msra.mxu0 0.0
        %420 = vmatprep.subr.mxu0 0.0
        %421 = vmatpush1.msra.mxu0 0.0
        %422 = vmatprep.subr.mxu0 0.0
        %423 = vmatpush1.msra.mxu0 0.0
        %424 = vmatprep.subr.mxu0 0.0
        %425 = vmatpush1.msra.mxu0 0.0
        %426 = vmatprep.subr.mxu0 0.0
        %427 = vmatpush1.msra.mxu0 0.0
        %428 = vmatprep.subr.mxu0 0.0
        %429 = vmatpush1.msra.mxu0 0.0
        %430 = vmatprep.subr.mxu0 0.0
        %431 = vmatpush1.msra.mxu0 0.0
        %432 = vmatprep.subr.mxu0 0.0
        %433 = vmatpush1.msra.mxu0 0.0
        %434 = vmatprep.subr.mxu0 0.0
        %435 = vmatpush1.msra.mxu0 0.0
        %436 = vmatprep.subr.mxu0 0.0
        %437 = vmatpush1.msra.mxu0 0.0
        %438 = vmatprep.subr.mxu0 0.0
        %439 = vmatpush1.msra.mxu0 0.0
        %440 = vmatprep.subr.mxu0 0.0
        %441 = vmatpush1.msra.mxu0 0.0
        %442 = vmatprep.subr.mxu0 0.0
        %443 = vmatpush1.msra.mxu0 0.0
        %444 = vmatprep.subr.mxu0 0.0
        %445 = vmatpush1.msra.mxu0 0.0
        %446 = vmatprep.subr.mxu0 0.0
        %447 = vmatpush1.msra.mxu0 0.0
        %448 = vmatprep.subr.mxu0 0.0
        %449 = vmatpush1.msra.mxu0 0.0
        %450 = vmatprep.subr.mxu0 0.0
        %451 = vmatpush1.msra.mxu0 0.0
        %452 = vmatprep.subr.mxu0 0.0
        %453 = vmatpush1.msra.mxu0 0.0
        %454 = vmatprep.subr.mxu0 0.0
        %455 = vmatpush1.msra.mxu0 0.0
        %456 = vmatprep.subr.mxu0 0.0
        %457 = vmatpush1.msra.mxu0 0.0
        %458 = vmatprep.subr.mxu0 0.0
        %459 = vmatpush1.msra.mxu0 0.0
        %460 = vmatprep.subr.mxu0 0.0
        %461 = vmatpush1.msra.mxu0 0.0
        %462 = vmatprep.subr.mxu0 0.0
        %463 = vmatpush1.msra.mxu0 0.0
        %464 = vmatprep.subr.mxu0 0.0
        %465 = vmatpush1.msra.mxu0 0.0
        %466 = vmatprep.subr.mxu0 0.0
        %467 = vmatpush1.msra.mxu0 0.0
        %468 = vmatprep.subr.mxu0 0.0
        %469 = vmatpush1.msra.mxu0 0.0
        %470 = vmatprep.subr.mxu0 0.0
        %471 = vmatpush1.msra.mxu0 0.0
        %472 = vmatprep.mubr.f32.mxu0 0.0
        %473 = vmatmul.mubr.f32.gmra.mrb[0].mxu0 %v402
        %v474 = vpop.f32.mrb[0].mxu0
        %v475 = vadd.f32 0.0, %v474
        %v476 = vpop.f32.mrb[0].mxu0
        %v477 = vadd.f32 0.0, %v476
        %478 = vdwg.mxu0
        %v479 = vadd.f32 %v389, %v475
        %v480 = vadd.f32 %v391, %v477
        %s481 = scalar_lea.vmem %s1, 24
        %v482 = vld [vmem:[%s481] sm:$0xff]
        %483 = vrot.lane.b32.xlu0 %v222, 112
        %v484 = vpop.permute.xlu0 %483
        %485 = vrot.lane.b32.xlu0 %v228, 112
        %v486 = vpop.permute.xlu0 %485
        %vm487 = vcmask 916480
        %v488 = vsel %vm487, %v484, %v486
        %v490 = vsel %vm235, %v482, 0
        %v492 = vsel %vm239, %v488, 0
        %v494 = vsel %vm239, %v486, 0
        %496 = vmatprep.subr.mxu0 %v494
        %497 = vmatpush1.msra.mxu0 %v492
        %498 = vmatprep.subr.mxu0 0.0
        %499 = vmatpush1.msra.mxu0 0.0
        %500 = vmatprep.subr.mxu0 0.0
        %501 = vmatpush1.msra.mxu0 0.0
        %502 = vmatprep.subr.mxu0 0.0
        %503 = vmatpush1.msra.mxu0 0.0
        %504 = vmatprep.subr.mxu0 0.0
        %505 = vmatpush1.msra.mxu0 0.0
        %506 = vmatprep.subr.mxu0 0.0
        %507 = vmatpush1.msra.mxu0 0.0
        %508 = vmatprep.subr.mxu0 0.0
        %509 = vmatpush1.msra.mxu0 0.0
        %510 = vmatprep.subr.mxu0 0.0
        %511 = vmatpush1.msra.mxu0 0.0
        %512 = vmatprep.subr.mxu0 0.0
        %513 = vmatpush1.msra.mxu0 0.0
        %514 = vmatprep.subr.mxu0 0.0
        %515 = vmatpush1.msra.mxu0 0.0
        %516 = vmatprep.subr.mxu0 0.0
        %517 = vmatpush1.msra.mxu0 0.0
        %518 = vmatprep.subr.mxu0 0.0
        %519 = vmatpush1.msra.mxu0 0.0
        %520 = vmatprep.subr.mxu0 0.0
        %521 = vmatpush1.msra.mxu0 0.0
        %522 = vmatprep.subr.mxu0 0.0
        %523 = vmatpush1.msra.mxu0 0.0
        %524 = vmatprep.subr.mxu0 0.0
        %525 = vmatpush1.msra.mxu0 0.0
        %526 = vmatprep.subr.mxu0 0.0
        %527 = vmatpush1.msra.mxu0 0.0
        %528 = vmatprep.subr.mxu0 0.0
        %529 = vmatpush1.msra.mxu0 0.0
        %530 = vmatprep.subr.mxu0 0.0
        %531 = vmatpush1.msra.mxu0 0.0
        %532 = vmatprep.subr.mxu0 0.0
        %533 = vmatpush1.msra.mxu0 0.0
        %534 = vmatprep.subr.mxu0 0.0
        %535 = vmatpush1.msra.mxu0 0.0
        %536 = vmatprep.subr.mxu0 0.0
        %537 = vmatpush1.msra.mxu0 0.0
        %538 = vmatprep.subr.mxu0 0.0
        %539 = vmatpush1.msra.mxu0 0.0
        %540 = vmatprep.subr.mxu0 0.0
        %541 = vmatpush1.msra.mxu0 0.0
        %542 = vmatprep.subr.mxu0 0.0
        %543 = vmatpush1.msra.mxu0 0.0
        %544 = vmatprep.subr.mxu0 0.0
        %545 = vmatpush1.msra.mxu0 0.0
        %546 = vmatprep.subr.mxu0 0.0
        %547 = vmatpush1.msra.mxu0 0.0
        %548 = vmatprep.subr.mxu0 0.0
        %549 = vmatpush1.msra.mxu0 0.0
        %550 = vmatprep.subr.mxu0 0.0
        %551 = vmatpush1.msra.mxu0 0.0
        %552 = vmatprep.subr.mxu0 0.0
        %553 = vmatpush1.msra.mxu0 0.0
        %554 = vmatprep.subr.mxu0 0.0
        %555 = vmatpush1.msra.mxu0 0.0
        %556 = vmatprep.subr.mxu0 0.0
        %557 = vmatpush1.msra.mxu0 0.0
        %558 = vmatprep.subr.mxu0 0.0
        %559 = vmatpush1.msra.mxu0 0.0
        %560 = vmatprep.mubr.f32.mxu0 0.0
        %561 = vmatmul.mubr.f32.gmra.mrb[0].mxu0 %v490
        %v562 = vpop.f32.mrb[0].mxu0
        %v563 = vadd.f32 0.0, %v562
        %v564 = vpop.f32.mrb[0].mxu0
        %v565 = vadd.f32 0.0, %v564
        %566 = vdwg.mxu0
        %v567 = vadd.f32 %v479, %v563
        %v568 = vadd.f32 %v480, %v565
        %s569 = scalar_lea.vmem %s1, 32
        %v570 = vld [vmem:[%s569] sm:$0xff]
        %571 = vrot.lane.b32.xlu0 %v222, 111
        %v572 = vpop.permute.xlu0 %571
        %573 = vrot.lane.b32.xlu0 %v228, 111
        %v574 = vpop.permute.xlu0 %573
        %vm575 = vcmask 908288
        %v576 = vsel %vm575, %v572, %v574
        %v578 = vsel %vm235, %v570, 0
        %v580 = vsel %vm239, %v576, 0
        %v582 = vsel %vm239, %v574, 0
        %584 = vmatprep.subr.mxu0 %v582
        %585 = vmatpush1.msra.mxu0 %v580
        %586 = vmatprep.subr.mxu0 0.0
        %587 = vmatpush1.msra.mxu0 0.0
        %588 = vmatprep.subr.mxu0 0.0
        %589 = vmatpush1.msra.mxu0 0.0
        %590 = vmatprep.subr.mxu0 0.0
        %591 = vmatpush1.msra.mxu0 0.0
        %592 = vmatprep.subr.mxu0 0.0
        %593 = vmatpush1.msra.mxu0 0.0
        %594 = vmatprep.subr.mxu0 0.0
        %595 = vmatpush1.msra.mxu0 0.0
        %596 = vmatprep.subr.mxu0 0.0
        %597 = vmatpush1.msra.mxu0 0.0
        %598 = vmatprep.subr.mxu0 0.0
        %599 = vmatpush1.msra.mxu0 0.0
        %600 = vmatprep.subr.mxu0 0.0
        %601 = vmatpush1.msra.mxu0 0.0
        %602 = vmatprep.subr.mxu0 0.0
        %603 = vmatpush1.msra.mxu0 0.0
        %604 = vmatprep.subr.mxu0 0.0
        %605 = vmatpush1.msra.mxu0 0.0
        %606 = vmatprep.subr.mxu0 0.0
        %607 = vmatpush1.msra.mxu0 0.0
        %608 = vmatprep.subr.mxu0 0.0
        %609 = vmatpush1.msra.mxu0 0.0
        %610 = vmatprep.subr.mxu0 0.0
        %611 = vmatpush1.msra.mxu0 0.0
        %612 = vmatprep.subr.mxu0 0.0
        %613 = vmatpush1.msra.mxu0 0.0
        %614 = vmatprep.subr.mxu0 0.0
        %615 = vmatpush1.msra.mxu0 0.0
        %616 = vmatprep.subr.mxu0 0.0
        %617 = vmatpush1.msra.mxu0 0.0
        %618 = vmatprep.subr.mxu0 0.0
        %619 = vmatpush1.msra.mxu0 0.0
        %620 = vmatprep.subr.mxu0 0.0
        %621 = vmatpush1.msra.mxu0 0.0
        %622 = vmatprep.subr.mxu0 0.0
        %623 = vmatpush1.msra.mxu0 0.0
        %624 = vmatprep.subr.mxu0 0.0
        %625 = vmatpush1.msra.mxu0 0.0
        %626 = vmatprep.subr.mxu0 0.0
        %627 = vmatpush1.msra.mxu0 0.0
        %628 = vmatprep.subr.mxu0 0.0
        %629 = vmatpush1.msra.mxu0 0.0
        %630 = vmatprep.subr.mxu0 0.0
        %631 = vmatpush1.msra.mxu0 0.0
        %632 = vmatprep.subr.mxu0 0.0
        %633 = vmatpush1.msra.mxu0 0.0
        %634 = vmatprep.subr.mxu0 0.0
        %635 = vmatpush1.msra.mxu0 0.0
        %636 = vmatprep.subr.mxu0 0.0
        %637 = vmatpush1.msra.mxu0 0.0
        %638 = vmatprep.subr.mxu0 0.0
        %639 = vmatpush1.msra.mxu0 0.0
        %640 = vmatprep.subr.mxu0 0.0
        %641 = vmatpush1.msra.mxu0 0.0
        %642 = vmatprep.subr.mxu0 0.0
        %643 = vmatpush1.msra.mxu0 0.0
        %644 = vmatprep.subr.mxu0 0.0
        %645 = vmatpush1.msra.mxu0 0.0
        %646 = vmatprep.subr.mxu0 0.0
        %647 = vmatpush1.msra.mxu0 0.0
        %648 = vmatprep.mubr.f32.mxu0 0.0
        %649 = vmatmul.mubr.f32.gmra.mrb[0].mxu0 %v578
        %v650 = vpop.f32.mrb[0].mxu0
        %v651 = vadd.f32 0.0, %v650
        %v652 = vpop.f32.mrb[0].mxu0
        %v653 = vadd.f32 0.0, %v652
        %654 = vdwg.mxu0
        %v655 = vadd.f32 %v567, %v651
        %v656 = vadd.f32 %v568, %v653
        %s657 = scalar_lea.vmem %s1, 40
        %v658 = vld [vmem:[%s657] sm:$0xff]
        %659 = vrot.lane.b32.xlu0 %v222, 110
        %v660 = vpop.permute.xlu0 %659
        %661 = vrot.lane.b32.xlu0 %v228, 110
        %v662 = vpop.permute.xlu0 %661
        %vm663 = vcmask 900096
        %v664 = vsel %vm663, %v660, %v662
        %v666 = vsel %vm235, %v658, 0
        %v668 = vsel %vm239, %v664, 0
        %v670 = vsel %vm239, %v662, 0
        %672 = vmatprep.subr.mxu0 %v670
        %673 = vmatpush1.msra.mxu0 %v668
        %674 = vmatprep.subr.mxu0 0.0
        %675 = vmatpush1.msra.mxu0 0.0
        %676 = vmatprep.subr.mxu0 0.0
        %677 = vmatpush1.msra.mxu0 0.0
        %678 = vmatprep.subr.mxu0 0.0
        %679 = vmatpush1.msra.mxu0 0.0
        %680 = vmatprep.subr.mxu0 0.0
        %681 = vmatpush1.msra.mxu0 0.0
        %682 = vmatprep.subr.mxu0 0.0
        %683 = vmatpush1.msra.mxu0 0.0
        %684 = vmatprep.subr.mxu0 0.0
        %685 = vmatpush1.msra.mxu0 0.0
        %686 = vmatprep.subr.mxu0 0.0
        %687 = vmatpush1.msra.mxu0 0.0
        %688 = vmatprep.subr.mxu0 0.0
        %689 = vmatpush1.msra.mxu0 0.0
        %690 = vmatprep.subr.mxu0 0.0
        %691 = vmatpush1.msra.mxu0 0.0
        %692 = vmatprep.subr.mxu0 0.0
        %693 = vmatpush1.msra.mxu0 0.0
        %694 = vmatprep.subr.mxu0 0.0
        %695 = vmatpush1.msra.mxu0 0.0
        %696 = vmatprep.subr.mxu0 0.0
        %697 = vmatpush1.msra.mxu0 0.0
        %698 = vmatprep.subr.mxu0 0.0
        %699 = vmatpush1.msra.mxu0 0.0
        %700 = vmatprep.subr.mxu0 0.0
        %701 = vmatpush1.msra.mxu0 0.0
        %702 = vmatprep.subr.mxu0 0.0
        %703 = vmatpush1.msra.mxu0 0.0
        %704 = vmatprep.subr.mxu0 0.0
        %705 = vmatpush1.msra.mxu0 0.0
        %706 = vmatprep.subr.mxu0 0.0
        %707 = vmatpush1.msra.mxu0 0.0
        %708 = vmatprep.subr.mxu0 0.0
        %709 = vmatpush1.msra.mxu0 0.0
        %710 = vmatprep.subr.mxu0 0.0
        %711 = vmatpush1.msra.mxu0 0.0
        %712 = vmatprep.subr.mxu0 0.0
        %713 = vmatpush1.msra.mxu0 0.0
        %714 = vmatprep.subr.mxu0 0.0
        %715 = vmatpush1.msra.mxu0 0.0
        %716 = vmatprep.subr.mxu0 0.0
        %717 = vmatpush1.msra.mxu0 0.0
        %718 = vmatprep.subr.mxu0 0.0
        %719 = vmatpush1.msra.mxu0 0.0
        %720 = vmatprep.subr.mxu0 0.0
        %721 = vmatpush1.msra.mxu0 0.0
        %722 = vmatprep.subr.mxu0 0.0
        %723 = vmatpush1.msra.mxu0 0.0
        %724 = vmatprep.subr.mxu0 0.0
        %725 = vmatpush1.msra.mxu0 0.0
        %726 = vmatprep.subr.mxu0 0.0
        %727 = vmatpush1.msra.mxu0 0.0
        %728 = vmatprep.subr.mxu0 0.0
        %729 = vmatpush1.msra.mxu0 0.0
        %730 = vmatprep.subr.mxu0 0.0
        %731 = vmatpush1.msra.mxu0 0.0
        %732 = vmatprep.subr.mxu0 0.0
        %733 = vmatpush1.msra.mxu0 0.0
        %734 = vmatprep.subr.mxu0 0.0
        %735 = vmatpush1.msra.mxu0 0.0
        %736 = vmatprep.mubr.f32.mxu0 0.0
        %737 = vmatmul.mubr.f32.gmra.mrb[0].mxu0 %v666
        %v738 = vpop.f32.mrb[0].mxu0
        %v739 = vadd.f32 0.0, %v738
        %v740 = vpop.f32.mrb[0].mxu0
        %v741 = vadd.f32 0.0, %v740
        %742 = vdwg.mxu0
        %v743 = vadd.f32 %v655, %v739
        %v744 = vadd.f32 %v656, %v741
        %s745 = scalar_lea.vmem %s1, 48
        %v746 = vld [vmem:[%s745] sm:$0xff]
        %748 = vrot.lane.b32.xlu0 %v222, 96
        %v749 = vpop.permute.xlu0 %748
        %750 = vrot.lane.b32.xlu0 %v228, 96
        %v751 = vpop.permute.xlu0 %750
        %752 = vrot.lane.b32.xlu0 %v223, 96
        %v753 = vpop.permute.xlu0 %752
        %vm754 = vcmask 785408
        %v755 = vsel %vm754, %v749, %v751
        %v756 = vsel %vm754, %v751, %v753
        %v758 = vsel %vm235, %v746, 0
        %v760 = vsel %vm239, %v755, 0
        %v762 = vsel %vm239, %v756, 0
        %764 = vmatprep.subr.mxu0 %v762
        %765 = vmatpush1.msra.mxu0 %v760
        %766 = vmatprep.subr.mxu0 0.0
        %767 = vmatpush1.msra.mxu0 0.0
        %768 = vmatprep.subr.mxu0 0.0
        %769 = vmatpush1.msra.mxu0 0.0
        %770 = vmatprep.subr.mxu0 0.0
        %771 = vmatpush1.msra.mxu0 0.0
        %772 = vmatprep.subr.mxu0 0.0
        %773 = vmatpush1.msra.mxu0 0.0
        %774 = vmatprep.subr.mxu0 0.0
        %775 = vmatpush1.msra.mxu0 0.0
        %776 = vmatprep.subr.mxu0 0.0
        %777 = vmatpush1.msra.mxu0 0.0
        %778 = vmatprep.subr.mxu0 0.0
        %779 = vmatpush1.msra.mxu0 0.0
        %780 = vmatprep.subr.mxu0 0.0
        %781 = vmatpush1.msra.mxu0 0.0
        %782 = vmatprep.subr.mxu0 0.0
        %783 = vmatpush1.msra.mxu0 0.0
        %784 = vmatprep.subr.mxu0 0.0
        %785 = vmatpush1.msra.mxu0 0.0
        %786 = vmatprep.subr.mxu0 0.0
        %787 = vmatpush1.msra.mxu0 0.0
        %788 = vmatprep.subr.mxu0 0.0
        %789 = vmatpush1.msra.mxu0 0.0
        %790 = vmatprep.subr.mxu0 0.0
        %791 = vmatpush1.msra.mxu0 0.0
        %792 = vmatprep.subr.mxu0 0.0
        %793 = vmatpush1.msra.mxu0 0.0
        %794 = vmatprep.subr.mxu0 0.0
        %795 = vmatpush1.msra.mxu0 0.0
        %796 = vmatprep.subr.mxu0 0.0
        %797 = vmatpush1.msra.mxu0 0.0
        %798 = vmatprep.subr.mxu0 0.0
        %799 = vmatpush1.msra.mxu0 0.0
        %800 = vmatprep.subr.mxu0 0.0
        %801 = vmatpush1.msra.mxu0 0.0
        %802 = vmatprep.subr.mxu0 0.0
        %803 = vmatpush1.msra.mxu0 0.0
        %804 = vmatprep.subr.mxu0 0.0
        %805 = vmatpush1.msra.mxu0 0.0
        %806 = vmatprep.subr.mxu0 0.0
        %807 = vmatpush1.msra.mxu0 0.0
        %808 = vmatprep.subr.mxu0 0.0
        %809 = vmatpush1.msra.mxu0 0.0
        %810 = vmatprep.subr.mxu0 0.0
        %811 = vmatpush1.msra.mxu0 0.0
        %812 = vmatprep.subr.mxu0 0.0
        %813 = vmatpush1.msra.mxu0 0.0
        %814 = vmatprep.subr.mxu0 0.0
        %815 = vmatpush1.msra.mxu0 0.0
        %816 = vmatprep.subr.mxu0 0.0
        %817 = vmatpush1.msra.mxu0 0.0
        %818 = vmatprep.subr.mxu0 0.0
        %819 = vmatpush1.msra.mxu0 0.0
        %820 = vmatprep.subr.mxu0 0.0
        %821 = vmatpush1.msra.mxu0 0.0
        %822 = vmatprep.subr.mxu0 0.0
        %823 = vmatpush1.msra.mxu0 0.0
        %824 = vmatprep.subr.mxu0 0.0
        %825 = vmatpush1.msra.mxu0 0.0
        %826 = vmatprep.subr.mxu0 0.0
        %827 = vmatpush1.msra.mxu0 0.0
        %828 = vmatprep.mubr.f32.mxu0 0.0
        %829 = vmatmul.mubr.f32.gmra.mrb[0].mxu0 %v758
        %v830 = vpop.f32.mrb[0].mxu0
        %v831 = vadd.f32 0.0, %v830
        %v832 = vpop.f32.mrb[0].mxu0
        %v833 = vadd.f32 0.0, %v832
        %834 = vdwg.mxu0
        %v835 = vadd.f32 %v743, %v831
        %v836 = vadd.f32 %v744, %v833
        %s837 = scalar_lea.vmem %s1, 56
        %v838 = vld [vmem:[%s837] sm:$0xff]
        %839 = vrot.lane.b32.xlu0 %v222, 95
        %v840 = vpop.permute.xlu0 %839
        %841 = vrot.lane.b32.xlu0 %v228, 95
        %v842 = vpop.permute.xlu0 %841
        %843 = vrot.lane.b32.xlu0 %v223, 95
        %v844 = vpop.permute.xlu0 %843
        %vm845 = vcmask 777216
        %v846 = vsel %vm845, %v840, %v842
        %v847 = vsel %vm845, %v842, %v844
        %v849 = vsel %vm235, %v838, 0
        %v851 = vsel %vm239, %v846, 0
        %v853 = vsel %vm239, %v847, 0
        %855 = vmatprep.subr.mxu0 %v853
        %856 = vmatpush1.msra.mxu0 %v851
        %857 = vmatprep.subr.mxu0 0.0
        %858 = vmatpush1.msra.mxu0 0.0
        %859 = vmatprep.subr.mxu0 0.0
        %860 = vmatpush1.msra.mxu0 0.0
        %861 = vmatprep.subr.mxu0 0.0
        %862 = vmatpush1.msra.mxu0 0.0
        %863 = vmatprep.subr.mxu0 0.0
        %864 = vmatpush1.msra.mxu0 0.0
        %865 = vmatprep.subr.mxu0 0.0
        %866 = vmatpush1.msra.mxu0 0.0
        %867 = vmatprep.subr.mxu0 0.0
        %868 = vmatpush1.msra.mxu0 0.0
        %869 = vmatprep.subr.mxu0 0.0
        %870 = vmatpush1.msra.mxu0 0.0
        %871 = vmatprep.subr.mxu0 0.0
        %872 = vmatpush1.msra.mxu0 0.0
        %873 = vmatprep.subr.mxu0 0.0
        %874 = vmatpush1.msra.mxu0 0.0
        %875 = vmatprep.subr.mxu0 0.0
        %876 = vmatpush1.msra.mxu0 0.0
        %877 = vmatprep.subr.mxu0 0.0
        %878 = vmatpush1.msra.mxu0 0.0
        %879 = vmatprep.subr.mxu0 0.0
        %880 = vmatpush1.msra.mxu0 0.0
        %881 = vmatprep.subr.mxu0 0.0
        %882 = vmatpush1.msra.mxu0 0.0
        %883 = vmatprep.subr.mxu0 0.0
        %884 = vmatpush1.msra.mxu0 0.0
        %885 = vmatprep.subr.mxu0 0.0
        %886 = vmatpush1.msra.mxu0 0.0
        %887 = vmatprep.subr.mxu0 0.0
        %888 = vmatpush1.msra.mxu0 0.0
        %889 = vmatprep.subr.mxu0 0.0
        %890 = vmatpush1.msra.mxu0 0.0
        %891 = vmatprep.subr.mxu0 0.0
        %892 = vmatpush1.msra.mxu0 0.0
        %893 = vmatprep.subr.mxu0 0.0
        %894 = vmatpush1.msra.mxu0 0.0
        %895 = vmatprep.subr.mxu0 0.0
        %896 = vmatpush1.msra.mxu0 0.0
        %897 = vmatprep.subr.mxu0 0.0
        %898 = vmatpush1.msra.mxu0 0.0
        %899 = vmatprep.subr.mxu0 0.0
        %900 = vmatpush1.msra.mxu0 0.0
        %901 = vmatprep.subr.mxu0 0.0
        %902 = vmatpush1.msra.mxu0 0.0
        %903 = vmatprep.subr.mxu0 0.0
        %904 = vmatpush1.msra.mxu0 0.0
        %905 = vmatprep.subr.mxu0 0.0
        %906 = vmatpush1.msra.mxu0 0.0
        %907 = vmatprep.subr.mxu0 0.0
        %908 = vmatpush1.msra.mxu0 0.0
        %909 = vmatprep.subr.mxu0 0.0
        %910 = vmatpush1.msra.mxu0 0.0
        %911 = vmatprep.subr.mxu0 0.0
        %912 = vmatpush1.msra.mxu0 0.0
        %913 = vmatprep.subr.mxu0 0.0
        %914 = vmatpush1.msra.mxu0 0.0
        %915 = vmatprep.subr.mxu0 0.0
        %916 = vmatpush1.msra.mxu0 0.0
        %917 = vmatprep.subr.mxu0 0.0
        %918 = vmatpush1.msra.mxu0 0.0
        %919 = vmatprep.mubr.f32.mxu0 0.0
        %920 = vmatmul.mubr.f32.gmra.mrb[0].mxu0 %v849
        %v921 = vpop.f32.mrb[0].mxu0
        %v922 = vadd.f32 0.0, %v921
        %v923 = vpop.f32.mrb[0].mxu0
        %v924 = vadd.f32 0.0, %v923
        %925 = vdwg.mxu0
        %v926 = vadd.f32 %v835, %v922
        %v927 = vadd.f32 %v836, %v924
        %s928 = scalar_lea.vmem %s1, 64
        %v929 = vld [vmem:[%s928] sm:$0xff]
        %930 = vrot.lane.b32.xlu0 %v222, 94
        %v931 = vpop.permute.xlu0 %930
        %932 = vrot.lane.b32.xlu0 %v228, 94
        %v933 = vpop.permute.xlu0 %932
        %934 = vrot.lane.b32.xlu0 %v223, 94
        %v935 = vpop.permute.xlu0 %934
        %vm936 = vcmask 769024
        %v937 = vsel %vm936, %v931, %v933
        %v938 = vsel %vm936, %v933, %v935
        %v940 = vsel %vm235, %v929, 0
        %v942 = vsel %vm239, %v937, 0
        %v944 = vsel %vm239, %v938, 0
        %946 = vmatprep.subr.mxu0 %v944
        %947 = vmatpush1.msra.mxu0 %v942
        %948 = vmatprep.subr.mxu0 0.0
        %949 = vmatpush1.msra.mxu0 0.0
        %950 = vmatprep.subr.mxu0 0.0
        %951 = vmatpush1.msra.mxu0 0.0
        %952 = vmatprep.subr.mxu0 0.0
        %953 = vmatpush1.msra.mxu0 0.0
        %954 = vmatprep.subr.mxu0 0.0
        %955 = vmatpush1.msra.mxu0 0.0
        %956 = vmatprep.subr.mxu0 0.0
        %957 = vmatpush1.msra.mxu0 0.0
        %958 = vmatprep.subr.mxu0 0.0
        %959 = vmatpush1.msra.mxu0 0.0
        %960 = vmatprep.subr.mxu0 0.0
        %961 = vmatpush1.msra.mxu0 0.0
        %962 = vmatprep.subr.mxu0 0.0
        %963 = vmatpush1.msra.mxu0 0.0
        %964 = vmatprep.subr.mxu0 0.0
        %965 = vmatpush1.msra.mxu0 0.0
        %966 = vmatprep.subr.mxu0 0.0
        %967 = vmatpush1.msra.mxu0 0.0
        %968 = vmatprep.subr.mxu0 0.0
        %969 = vmatpush1.msra.mxu0 0.0
        %970 = vmatprep.subr.mxu0 0.0
        %971 = vmatpush1.msra.mxu0 0.0
        %972 = vmatprep.subr.mxu0 0.0
        %973 = vmatpush1.msra.mxu0 0.0
        %974 = vmatprep.subr.mxu0 0.0
        %975 = vmatpush1.msra.mxu0 0.0
        %976 = vmatprep.subr.mxu0 0.0
        %977 = vmatpush1.msra.mxu0 0.0
        %978 = vmatprep.subr.mxu0 0.0
        %979 = vmatpush1.msra.mxu0 0.0
        %980 = vmatprep.subr.mxu0 0.0
        %981 = vmatpush1.msra.mxu0 0.0
        %982 = vmatprep.subr.mxu0 0.0
        %983 = vmatpush1.msra.mxu0 0.0
        %984 = vmatprep.subr.mxu0 0.0
        %985 = vmatpush1.msra.mxu0 0.0
        %986 = vmatprep.subr.mxu0 0.0
        %987 = vmatpush1.msra.mxu0 0.0
        %988 = vmatprep.subr.mxu0 0.0
        %989 = vmatpush1.msra.mxu0 0.0
        %990 = vmatprep.subr.mxu0 0.0
        %991 = vmatpush1.msra.mxu0 0.0
        %992 = vmatprep.subr.mxu0 0.0
        %993 = vmatpush1.msra.mxu0 0.0
        %994 = vmatprep.subr.mxu0 0.0
        %995 = vmatpush1.msra.mxu0 0.0
        %996 = vmatprep.subr.mxu0 0.0
        %997 = vmatpush1.msra.mxu0 0.0
        %998 = vmatprep.subr.mxu0 0.0
        %999 = vmatpush1.msra.mxu0 0.0
        %1000 = vmatprep.subr.mxu0 0.0
        %1001 = vmatpush1.msra.mxu0 0.0
        %1002 = vmatprep.subr.mxu0 0.0
        %1003 = vmatpush1.msra.mxu0 0.0
        %1004 = vmatprep.subr.mxu0 0.0
        %1005 = vmatpush1.msra.mxu0 0.0
        %1006 = vmatprep.subr.mxu0 0.0
        %1007 = vmatpush1.msra.mxu0 0.0
        %1008 = vmatprep.subr.mxu0 0.0
        %1009 = vmatpush1.msra.mxu0 0.0
        %1010 = vmatprep.mubr.f32.mxu0 0.0
        %1011 = vmatmul.mubr.f32.gmra.mrb[0].mxu0 %v940
        %v1012 = vpop.f32.mrb[0].mxu0
        %v1013 = vadd.f32 0.0, %v1012
        %v1014 = vpop.f32.mrb[0].mxu0
        %v1015 = vadd.f32 0.0, %v1014
        %1016 = vdwg.mxu0
        %v1017 = vadd.f32 %v926, %v1013
        %v1018 = vadd.f32 %v927, %v1015
        %v1019 = vld [vmem:[%s2] sm:$0xff]
        %s1020 = scalar_lea.vmem %s2, 8
        %v1021 = vld [vmem:[%s1020] sm:$0xff]
        %1024 = vrot.lane.b32.xlu0 %v1017, 127
        %v1025 = vpop.permute.xlu0 %1024
        %1026 = vrot.lane.b32.xlu0 %v1018, 127
        %v1027 = vpop.permute.xlu0 %1026
        %v1028 = vsel %vm233, %v1025, %v1027
        %vm1031 = vcmask 64512
        %v1033 = vsel %vm1031, %v1021, 0
        %1035 = vmatprep.subr.mxu0 %v1027
        %1036 = vmatpush1.msra.mxu0 %v1028
        %1037 = vmatprep.subr.mxu0 0.0
        %1038 = vmatpush1.msra.mxu0 0.0
        %1039 = vmatprep.subr.mxu0 0.0
        %1040 = vmatpush1.msra.mxu0 0.0
        %1041 = vmatprep.subr.mxu0 0.0
        %1042 = vmatpush1.msra.mxu0 0.0
        %1043 = vmatprep.subr.mxu0 0.0
        %1044 = vmatpush1.msra.mxu0 0.0
        %1045 = vmatprep.subr.mxu0 0.0
        %1046 = vmatpush1.msra.mxu0 0.0
        %1047 = vmatprep.subr.mxu0 0.0
        %1048 = vmatpush1.msra.mxu0 0.0
        %1049 = vmatprep.subr.mxu0 0.0
        %1050 = vmatpush1.msra.mxu0 0.0
        %1051 = vmatprep.subr.mxu0 0.0
        %1052 = vmatpush1.msra.mxu0 0.0
        %1053 = vmatprep.subr.mxu0 0.0
        %1054 = vmatpush1.msra.mxu0 0.0
        %1055 = vmatprep.subr.mxu0 0.0
        %1056 = vmatpush1.msra.mxu0 0.0
        %1057 = vmatprep.subr.mxu0 0.0
        %1058 = vmatpush1.msra.mxu0 0.0
        %1059 = vmatprep.subr.mxu0 0.0
        %1060 = vmatpush1.msra.mxu0 0.0
        %1061 = vmatprep.subr.mxu0 0.0
        %1062 = vmatpush1.msra.mxu0 0.0
        %1063 = vmatprep.subr.mxu0 0.0
        %1064 = vmatpush1.msra.mxu0 0.0
        %1065 = vmatprep.subr.mxu0 0.0
        %1066 = vmatpush1.msra.mxu0 0.0
        %1067 = vmatprep.subr.mxu0 0.0
        %1068 = vmatpush1.msra.mxu0 0.0
        %1069 = vmatprep.subr.mxu0 0.0
        %1070 = vmatpush1.msra.mxu0 0.0
        %1071 = vmatprep.subr.mxu0 0.0
        %1072 = vmatpush1.msra.mxu0 0.0
        %1073 = vmatprep.subr.mxu0 0.0
        %1074 = vmatpush1.msra.mxu0 0.0
        %1075 = vmatprep.subr.mxu0 0.0
        %1076 = vmatpush1.msra.mxu0 0.0
        %1077 = vmatprep.subr.mxu0 0.0
        %1078 = vmatpush1.msra.mxu0 0.0
        %1079 = vmatprep.subr.mxu0 0.0
        %1080 = vmatpush1.msra.mxu0 0.0
        %1081 = vmatprep.subr.mxu0 0.0
        %1082 = vmatpush1.msra.mxu0 0.0
        %1083 = vmatprep.subr.mxu0 0.0
        %1084 = vmatpush1.msra.mxu0 0.0
        %1085 = vmatprep.subr.mxu0 0.0
        %1086 = vmatpush1.msra.mxu0 0.0
        %1087 = vmatprep.subr.mxu0 0.0
        %1088 = vmatpush1.msra.mxu0 0.0
        %1089 = vmatprep.subr.mxu0 0.0
        %1090 = vmatpush1.msra.mxu0 0.0
        %1091 = vmatprep.subr.mxu0 0.0
        %1092 = vmatpush1.msra.mxu0 0.0
        %1093 = vmatprep.subr.mxu0 0.0
        %1094 = vmatpush1.msra.mxu0 0.0
        %1095 = vmatprep.subr.mxu0 0.0
        %1096 = vmatpush1.msra.mxu0 0.0
        %1097 = vmatprep.subr.mxu0 0.0
        %1098 = vmatpush1.msra.mxu0 0.0
        %1099 = vmatprep.mubr.f32.mxu0 0.0
        %1100 = vmatmul.mubr.f32.gmra.mrb[0].mxu0 %v1033
        %v1101 = vpop.f32.mrb[0].mxu0
        %v1102 = vadd.f32 0.0, %v1101
        %v1103 = vpop.f32.mrb[0].mxu0
        %v1104 = vadd.f32 0.0, %v1103
        %1105 = vdwg.mxu0
        %v1107 = vsel %vm1031, %v1019, 0
        %1109 = vmatprep.subr.mxu0 %v1018
        %1110 = vmatpush1.msra.mxu0 %v1017
        %1111 = vmatprep.subr.mxu0 0.0
        %1112 = vmatpush1.msra.mxu0 0.0
        %1113 = vmatprep.subr.mxu0 0.0
        %1114 = vmatpush1.msra.mxu0 0.0
        %1115 = vmatprep.subr.mxu0 0.0
        %1116 = vmatpush1.msra.mxu0 0.0
        %1117 = vmatprep.subr.mxu0 0.0
        %1118 = vmatpush1.msra.mxu0 0.0
        %1119 = vmatprep.subr.mxu0 0.0
        %1120 = vmatpush1.msra.mxu0 0.0
        %1121 = vmatprep.subr.mxu0 0.0
        %1122 = vmatpush1.msra.mxu0 0.0
        %1123 = vmatprep.subr.mxu0 0.0
        %1124 = vmatpush1.msra.mxu0 0.0
        %1125 = vmatprep.subr.mxu0 0.0
        %1126 = vmatpush1.msra.mxu0 0.0
        %1127 = vmatprep.subr.mxu0 0.0
        %1128 = vmatpush1.msra.mxu0 0.0
        %1129 = vmatprep.subr.mxu0 0.0
        %1130 = vmatpush1.msra.mxu0 0.0
        %1131 = vmatprep.subr.mxu0 0.0
        %1132 = vmatpush1.msra.mxu0 0.0
        %1133 = vmatprep.subr.mxu0 0.0
        %1134 = vmatpush1.msra.mxu0 0.0
        %1135 = vmatprep.subr.mxu0 0.0
        %1136 = vmatpush1.msra.mxu0 0.0
        %1137 = vmatprep.subr.mxu0 0.0
        %1138 = vmatpush1.msra.mxu0 0.0
        %1139 = vmatprep.subr.mxu0 0.0
        %1140 = vmatpush1.msra.mxu0 0.0
        %1141 = vmatprep.subr.mxu0 0.0
        %1142 = vmatpush1.msra.mxu0 0.0
        %1143 = vmatprep.subr.mxu0 0.0
        %1144 = vmatpush1.msra.mxu0 0.0
        %1145 = vmatprep.subr.mxu0 0.0
        %1146 = vmatpush1.msra.mxu0 0.0
        %1147 = vmatprep.subr.mxu0 0.0
        %1148 = vmatpush1.msra.mxu0 0.0
        %1149 = vmatprep.subr.mxu0 0.0
        %1150 = vmatpush1.msra.mxu0 0.0
        %1151 = vmatprep.subr.mxu0 0.0
        %1152 = vmatpush1.msra.mxu0 0.0
        %1153 = vmatprep.subr.mxu0 0.0
        %1154 = vmatpush1.msra.mxu0 0.0
        %1155 = vmatprep.subr.mxu0 0.0
        %1156 = vmatpush1.msra.mxu0 0.0
        %1157 = vmatprep.subr.mxu0 0.0
        %1158 = vmatpush1.msra.mxu0 0.0
        %1159 = vmatprep.subr.mxu0 0.0
        %1160 = vmatpush1.msra.mxu0 0.0
        %1161 = vmatprep.subr.mxu0 0.0
        %1162 = vmatpush1.msra.mxu0 0.0
        %1163 = vmatprep.subr.mxu0 0.0
        %1164 = vmatpush1.msra.mxu0 0.0
        %1165 = vmatprep.subr.mxu0 0.0
        %1166 = vmatpush1.msra.mxu0 0.0
        %1167 = vmatprep.subr.mxu0 0.0
        %1168 = vmatpush1.msra.mxu0 0.0
        %1169 = vmatprep.subr.mxu0 0.0
        %1170 = vmatpush1.msra.mxu0 0.0
        %1171 = vmatprep.subr.mxu0 0.0
        %1172 = vmatpush1.msra.mxu0 0.0
        %1173 = vmatprep.mubr.f32.mxu0 0.0
        %1174 = vmatmul.mubr.f32.gmra.mrb[0].mxu0 %v1107
        %v1175 = vpop.f32.mrb[0].mxu0
        %v1176 = vadd.f32 %v1102, %v1175
        %v1177 = vpop.f32.mrb[0].mxu0
        %v1178 = vadd.f32 %v1104, %v1177
        %1179 = vdwg.mxu0
        %s1180 = scalar_lea.vmem %s2, 16
        %v1181 = vld [vmem:[%s1180] sm:$0xff]
        %1182 = vrot.lane.b32.xlu0 %v1017, 126
        %v1183 = vpop.permute.xlu0 %1182
        %1184 = vrot.lane.b32.xlu0 %v1018, 126
        %v1185 = vpop.permute.xlu0 %1184
        %v1186 = vsel %vm399, %v1183, %v1185
        %v1190 = vsel %vm1031, %v1181, 0
        %1192 = vmatprep.subr.mxu0 %v1185
        %1193 = vmatpush1.msra.mxu0 %v1186
        %1194 = vmatprep.subr.mxu0 0.0
        %1195 = vmatpush1.msra.mxu0 0.0
        %1196 = vmatprep.subr.mxu0 0.0
        %1197 = vmatpush1.msra.mxu0 0.0
        %1198 = vmatprep.subr.mxu0 0.0
        %1199 = vmatpush1.msra.mxu0 0.0
        %1200 = vmatprep.subr.mxu0 0.0
        %1201 = vmatpush1.msra.mxu0 0.0
        %1202 = vmatprep.subr.mxu0 0.0
        %1203 = vmatpush1.msra.mxu0 0.0
        %1204 = vmatprep.subr.mxu0 0.0
        %1205 = vmatpush1.msra.mxu0 0.0
        %1206 = vmatprep.subr.mxu0 0.0
        %1207 = vmatpush1.msra.mxu0 0.0
        %1208 = vmatprep.subr.mxu0 0.0
        %1209 = vmatpush1.msra.mxu0 0.0
        %1210 = vmatprep.subr.mxu0 0.0
        %1211 = vmatpush1.msra.mxu0 0.0
        %1212 = vmatprep.subr.mxu0 0.0
        %1213 = vmatpush1.msra.mxu0 0.0
        %1214 = vmatprep.subr.mxu0 0.0
        %1215 = vmatpush1.msra.mxu0 0.0
        %1216 = vmatprep.subr.mxu0 0.0
        %1217 = vmatpush1.msra.mxu0 0.0
        %1218 = vmatprep.subr.mxu0 0.0
        %1219 = vmatpush1.msra.mxu0 0.0
        %1220 = vmatprep.subr.mxu0 0.0
        %1221 = vmatpush1.msra.mxu0 0.0
        %1222 = vmatprep.subr.mxu0 0.0
        %1223 = vmatpush1.msra.mxu0 0.0
        %1224 = vmatprep.subr.mxu0 0.0
        %1225 = vmatpush1.msra.mxu0 0.0
        %1226 = vmatprep.subr.mxu0 0.0
        %1227 = vmatpush1.msra.mxu0 0.0
        %1228 = vmatprep.subr.mxu0 0.0
        %1229 = vmatpush1.msra.mxu0 0.0
        %1230 = vmatprep.subr.mxu0 0.0
        %1231 = vmatpush1.msra.mxu0 0.0
        %1232 = vmatprep.subr.mxu0 0.0
        %1233 = vmatpush1.msra.mxu0 0.0
        %1234 = vmatprep.subr.mxu0 0.0
        %1235 = vmatpush1.msra.mxu0 0.0
        %1236 = vmatprep.subr.mxu0 0.0
        %1237 = vmatpush1.msra.mxu0 0.0
        %1238 = vmatprep.subr.mxu0 0.0
        %1239 = vmatpush1.msra.mxu0 0.0
        %1240 = vmatprep.subr.mxu0 0.0
        %1241 = vmatpush1.msra.mxu0 0.0
        %1242 = vmatprep.subr.mxu0 0.0
        %1243 = vmatpush1.msra.mxu0 0.0
        %1244 = vmatprep.subr.mxu0 0.0
        %1245 = vmatpush1.msra.mxu0 0.0
        %1246 = vmatprep.subr.mxu0 0.0
        %1247 = vmatpush1.msra.mxu0 0.0
        %1248 = vmatprep.subr.mxu0 0.0
        %1249 = vmatpush1.msra.mxu0 0.0
        %1250 = vmatprep.subr.mxu0 0.0
        %1251 = vmatpush1.msra.mxu0 0.0
        %1252 = vmatprep.subr.mxu0 0.0
        %1253 = vmatpush1.msra.mxu0 0.0
        %1254 = vmatprep.subr.mxu0 0.0
        %1255 = vmatpush1.msra.mxu0 0.0
        %1256 = vmatprep.mubr.f32.mxu0 0.0
        %1257 = vmatmul.mubr.f32.gmra.mrb[0].mxu0 %v1190
        %v1258 = vpop.f32.mrb[0].mxu0
        %v1259 = vadd.f32 0.0, %v1258
        %v1260 = vpop.f32.mrb[0].mxu0
        %v1261 = vadd.f32 0.0, %v1260
        %1262 = vdwg.mxu0
        %v1263 = vadd.f32 %v1176, %v1259
        %v1264 = vadd.f32 %v1178, %v1261
        %s1265 = scalar_lea.vmem %s2, 24
        %v1266 = vld [vmem:[%s1265] sm:$0xff]
        %1267 = vrot.lane.b32.xlu0 %v1017, 112
        %v1268 = vpop.permute.xlu0 %1267
        %1269 = vrot.lane.b32.xlu0 %v1018, 112
        %v1270 = vpop.permute.xlu0 %1269
        %v1271 = vsel %vm487, %v1268, %v1270
        %v1275 = vsel %vm1031, %v1266, 0
        %1277 = vmatprep.subr.mxu0 %v1270
        %1278 = vmatpush1.msra.mxu0 %v1271
        %1279 = vmatprep.subr.mxu0 0.0
        %1280 = vmatpush1.msra.mxu0 0.0
        %1281 = vmatprep.subr.mxu0 0.0
        %1282 = vmatpush1.msra.mxu0 0.0
        %1283 = vmatprep.subr.mxu0 0.0
        %1284 = vmatpush1.msra.mxu0 0.0
        %1285 = vmatprep.subr.mxu0 0.0
        %1286 = vmatpush1.msra.mxu0 0.0
        %1287 = vmatprep.subr.mxu0 0.0
        %1288 = vmatpush1.msra.mxu0 0.0
        %1289 = vmatprep.subr.mxu0 0.0
        %1290 = vmatpush1.msra.mxu0 0.0
        %1291 = vmatprep.subr.mxu0 0.0
        %1292 = vmatpush1.msra.mxu0 0.0
        %1293 = vmatprep.subr.mxu0 0.0
        %1294 = vmatpush1.msra.mxu0 0.0
        %1295 = vmatprep.subr.mxu0 0.0
        %1296 = vmatpush1.msra.mxu0 0.0
        %1297 = vmatprep.subr.mxu0 0.0
        %1298 = vmatpush1.msra.mxu0 0.0
        %1299 = vmatprep.subr.mxu0 0.0
        %1300 = vmatpush1.msra.mxu0 0.0
        %1301 = vmatprep.subr.mxu0 0.0
        %1302 = vmatpush1.msra.mxu0 0.0
        %1303 = vmatprep.subr.mxu0 0.0
        %1304 = vmatpush1.msra.mxu0 0.0
        %1305 = vmatprep.subr.mxu0 0.0
        %1306 = vmatpush1.msra.mxu0 0.0
        %1307 = vmatprep.subr.mxu0 0.0
        %1308 = vmatpush1.msra.mxu0 0.0
        %1309 = vmatprep.subr.mxu0 0.0
        %1310 = vmatpush1.msra.mxu0 0.0
        %1311 = vmatprep.subr.mxu0 0.0
        %1312 = vmatpush1.msra.mxu0 0.0
        %1313 = vmatprep.subr.mxu0 0.0
        %1314 = vmatpush1.msra.mxu0 0.0
        %1315 = vmatprep.subr.mxu0 0.0
        %1316 = vmatpush1.msra.mxu0 0.0
        %1317 = vmatprep.subr.mxu0 0.0
        %1318 = vmatpush1.msra.mxu0 0.0
        %1319 = vmatprep.subr.mxu0 0.0
        %1320 = vmatpush1.msra.mxu0 0.0
        %1321 = vmatprep.subr.mxu0 0.0
        %1322 = vmatpush1.msra.mxu0 0.0
        %1323 = vmatprep.subr.mxu0 0.0
        %1324 = vmatpush1.msra.mxu0 0.0
        %1325 = vmatprep.subr.mxu0 0.0
        %1326 = vmatpush1.msra.mxu0 0.0
        %1327 = vmatprep.subr.mxu0 0.0
        %1328 = vmatpush1.msra.mxu0 0.0
        %1329 = vmatprep.subr.mxu0 0.0
        %1330 = vmatpush1.msra.mxu0 0.0
        %1331 = vmatprep.subr.mxu0 0.0
        %1332 = vmatpush1.msra.mxu0 0.0
        %1333 = vmatprep.subr.mxu0 0.0
        %1334 = vmatpush1.msra.mxu0 0.0
        %1335 = vmatprep.subr.mxu0 0.0
        %1336 = vmatpush1.msra.mxu0 0.0
        %1337 = vmatprep.subr.mxu0 0.0
        %1338 = vmatpush1.msra.mxu0 0.0
        %1339 = vmatprep.subr.mxu0 0.0
        %1340 = vmatpush1.msra.mxu0 0.0
        %1341 = vmatprep.mubr.f32.mxu0 0.0
        %1342 = vmatmul.mubr.f32.gmra.mrb[0].mxu0 %v1275
        %v1343 = vpop.f32.mrb[0].mxu0
        %v1344 = vadd.f32 0.0, %v1343
        %v1345 = vpop.f32.mrb[0].mxu0
        %v1346 = vadd.f32 0.0, %v1345
        %1347 = vdwg.mxu0
        %v1348 = vadd.f32 %v1263, %v1344
        %v1349 = vadd.f32 %v1264, %v1346
        %s1350 = scalar_lea.vmem %s2, 32
        %v1351 = vld [vmem:[%s1350] sm:$0xff]
        %1352 = vrot.lane.b32.xlu0 %v1017, 111
        %v1353 = vpop.permute.xlu0 %1352
        %1354 = vrot.lane.b32.xlu0 %v1018, 111
        %v1355 = vpop.permute.xlu0 %1354
        %v1356 = vsel %vm575, %v1353, %v1355
        %v1360 = vsel %vm1031, %v1351, 0
        %1362 = vmatprep.subr.mxu0 %v1355
        %1363 = vmatpush1.msra.mxu0 %v1356
        %1364 = vmatprep.subr.mxu0 0.0
        %1365 = vmatpush1.msra.mxu0 0.0
        %1366 = vmatprep.subr.mxu0 0.0
        %1367 = vmatpush1.msra.mxu0 0.0
        %1368 = vmatprep.subr.mxu0 0.0
        %1369 = vmatpush1.msra.mxu0 0.0
        %1370 = vmatprep.subr.mxu0 0.0
        %1371 = vmatpush1.msra.mxu0 0.0
        %1372 = vmatprep.subr.mxu0 0.0
        %1373 = vmatpush1.msra.mxu0 0.0
        %1374 = vmatprep.subr.mxu0 0.0
        %1375 = vmatpush1.msra.mxu0 0.0
        %1376 = vmatprep.subr.mxu0 0.0
        %1377 = vmatpush1.msra.mxu0 0.0
        %1378 = vmatprep.subr.mxu0 0.0
        %1379 = vmatpush1.msra.mxu0 0.0
        %1380 = vmatprep.subr.mxu0 0.0
        %1381 = vmatpush1.msra.mxu0 0.0
        %1382 = vmatprep.subr.mxu0 0.0
        %1383 = vmatpush1.msra.mxu0 0.0
        %1384 = vmatprep.subr.mxu0 0.0
        %1385 = vmatpush1.msra.mxu0 0.0
        %1386 = vmatprep.subr.mxu0 0.0
        %1387 = vmatpush1.msra.mxu0 0.0
        %1388 = vmatprep.subr.mxu0 0.0
        %1389 = vmatpush1.msra.mxu0 0.0
        %1390 = vmatprep.subr.mxu0 0.0
        %1391 = vmatpush1.msra.mxu0 0.0
        %1392 = vmatprep.subr.mxu0 0.0
        %1393 = vmatpush1.msra.mxu0 0.0
        %1394 = vmatprep.subr.mxu0 0.0
        %1395 = vmatpush1.msra.mxu0 0.0
        %1396 = vmatprep.subr.mxu0 0.0
        %1397 = vmatpush1.msra.mxu0 0.0
        %1398 = vmatprep.subr.mxu0 0.0
        %1399 = vmatpush1.msra.mxu0 0.0
        %1400 = vmatprep.subr.mxu0 0.0
        %1401 = vmatpush1.msra.mxu0 0.0
        %1402 = vmatprep.subr.mxu0 0.0
        %1403 = vmatpush1.msra.mxu0 0.0
        %1404 = vmatprep.subr.mxu0 0.0
        %1405 = vmatpush1.msra.mxu0 0.0
        %1406 = vmatprep.subr.mxu0 0.0
        %1407 = vmatpush1.msra.mxu0 0.0
        %1408 = vmatprep.subr.mxu0 0.0
        %1409 = vmatpush1.msra.mxu0 0.0
        %1410 = vmatprep.subr.mxu0 0.0
        %1411 = vmatpush1.msra.mxu0 0.0
        %1412 = vmatprep.subr.mxu0 0.0
        %1413 = vmatpush1.msra.mxu0 0.0
        %1414 = vmatprep.subr.mxu0 0.0
        %1415 = vmatpush1.msra.mxu0 0.0
        %1416 = vmatprep.subr.mxu0 0.0
        %1417 = vmatpush1.msra.mxu0 0.0
        %1418 = vmatprep.subr.mxu0 0.0
        %1419 = vmatpush1.msra.mxu0 0.0
        %1420 = vmatprep.subr.mxu0 0.0
        %1421 = vmatpush1.msra.mxu0 0.0
        %1422 = vmatprep.subr.mxu0 0.0
        %1423 = vmatpush1.msra.mxu0 0.0
        %1424 = vmatprep.subr.mxu0 0.0
        %1425 = vmatpush1.msra.mxu0 0.0
        %1426 = vmatprep.mubr.f32.mxu0 0.0
        %1427 = vmatmul.mubr.f32.gmra.mrb[0].mxu0 %v1360
        %v1428 = vpop.f32.mrb[0].mxu0
        %v1429 = vadd.f32 0.0, %v1428
        %v1430 = vpop.f32.mrb[0].mxu0
        %v1431 = vadd.f32 0.0, %v1430
        %1432 = vdwg.mxu0
        %v1433 = vadd.f32 %v1348, %v1429
        %v1434 = vadd.f32 %v1349, %v1431
        %s1435 = scalar_lea.vmem %s2, 40
        %v1436 = vld [vmem:[%s1435] sm:$0xff]
        %1437 = vrot.lane.b32.xlu0 %v1017, 110
        %v1438 = vpop.permute.xlu0 %1437
        %1439 = vrot.lane.b32.xlu0 %v1018, 110
        %v1440 = vpop.permute.xlu0 %1439
        %v1441 = vsel %vm663, %v1438, %v1440
        %v1445 = vsel %vm1031, %v1436, 0
        %1447 = vmatprep.subr.mxu0 %v1440
        %1448 = vmatpush1.msra.mxu0 %v1441
        %1449 = vmatprep.subr.mxu0 0.0
        %1450 = vmatpush1.msra.mxu0 0.0
        %1451 = vmatprep.subr.mxu0 0.0
        %1452 = vmatpush1.msra.mxu0 0.0
        %1453 = vmatprep.subr.mxu0 0.0
        %1454 = vmatpush1.msra.mxu0 0.0
        %1455 = vmatprep.subr.mxu0 0.0
        %1456 = vmatpush1.msra.mxu0 0.0
        %1457 = vmatprep.subr.mxu0 0.0
        %1458 = vmatpush1.msra.mxu0 0.0
        %1459 = vmatprep.subr.mxu0 0.0
        %1460 = vmatpush1.msra.mxu0 0.0
        %1461 = vmatprep.subr.mxu0 0.0
        %1462 = vmatpush1.msra.mxu0 0.0
        %1463 = vmatprep.subr.mxu0 0.0
        %1464 = vmatpush1.msra.mxu0 0.0
        %1465 = vmatprep.subr.mxu0 0.0
        %1466 = vmatpush1.msra.mxu0 0.0
        %1467 = vmatprep.subr.mxu0 0.0
        %1468 = vmatpush1.msra.mxu0 0.0
        %1469 = vmatprep.subr.mxu0 0.0
        %1470 = vmatpush1.msra.mxu0 0.0
        %1471 = vmatprep.subr.mxu0 0.0
        %1472 = vmatpush1.msra.mxu0 0.0
        %1473 = vmatprep.subr.mxu0 0.0
        %1474 = vmatpush1.msra.mxu0 0.0
        %1475 = vmatprep.subr.mxu0 0.0
        %1476 = vmatpush1.msra.mxu0 0.0
        %1477 = vmatprep.subr.mxu0 0.0
        %1478 = vmatpush1.msra.mxu0 0.0
        %1479 = vmatprep.subr.mxu0 0.0
        %1480 = vmatpush1.msra.mxu0 0.0
        %1481 = vmatprep.subr.mxu0 0.0
        %1482 = vmatpush1.msra.mxu0 0.0
        %1483 = vmatprep.subr.mxu0 0.0
        %1484 = vmatpush1.msra.mxu0 0.0
        %1485 = vmatprep.subr.mxu0 0.0
        %1486 = vmatpush1.msra.mxu0 0.0
        %1487 = vmatprep.subr.mxu0 0.0
        %1488 = vmatpush1.msra.mxu0 0.0
        %1489 = vmatprep.subr.mxu0 0.0
        %1490 = vmatpush1.msra.mxu0 0.0
        %1491 = vmatprep.subr.mxu0 0.0
        %1492 = vmatpush1.msra.mxu0 0.0
        %1493 = vmatprep.subr.mxu0 0.0
        %1494 = vmatpush1.msra.mxu0 0.0
        %1495 = vmatprep.subr.mxu0 0.0
        %1496 = vmatpush1.msra.mxu0 0.0
        %1497 = vmatprep.subr.mxu0 0.0
        %1498 = vmatpush1.msra.mxu0 0.0
        %1499 = vmatprep.subr.mxu0 0.0
        %1500 = vmatpush1.msra.mxu0 0.0
        %1501 = vmatprep.subr.mxu0 0.0
        %1502 = vmatpush1.msra.mxu0 0.0
        %1503 = vmatprep.subr.mxu0 0.0
        %1504 = vmatpush1.msra.mxu0 0.0
        %1505 = vmatprep.subr.mxu0 0.0
        %1506 = vmatpush1.msra.mxu0 0.0
        %1507 = vmatprep.subr.mxu0 0.0
        %1508 = vmatpush1.msra.mxu0 0.0
        %1509 = vmatprep.subr.mxu0 0.0
        %1510 = vmatpush1.msra.mxu0 0.0
        %1511 = vmatprep.mubr.f32.mxu0 0.0
        %1512 = vmatmul.mubr.f32.gmra.mrb[0].mxu0 %v1445
        %v1513 = vpop.f32.mrb[0].mxu0
        %v1514 = vadd.f32 0.0, %v1513
        %v1515 = vpop.f32.mrb[0].mxu0
        %v1516 = vadd.f32 0.0, %v1515
        %1517 = vdwg.mxu0
        %v1518 = vadd.f32 %v1433, %v1514
        %v1519 = vadd.f32 %v1434, %v1516
        %s1520 = scalar_lea.vmem %s2, 48
        %v1521 = vld [vmem:[%s1520] sm:$0xff]
        %1522 = vrot.lane.b32.xlu0 %v1017, 96
        %v1523 = vpop.permute.xlu0 %1522
        %1524 = vrot.lane.b32.xlu0 %v1018, 96
        %v1525 = vpop.permute.xlu0 %1524
        %v1526 = vsel %vm754, %v1523, %v1525
        %v1530 = vsel %vm1031, %v1521, 0
        %1532 = vmatprep.subr.mxu0 %v1525
        %1533 = vmatpush1.msra.mxu0 %v1526
        %1534 = vmatprep.subr.mxu0 0.0
        %1535 = vmatpush1.msra.mxu0 0.0
        %1536 = vmatprep.subr.mxu0 0.0
        %1537 = vmatpush1.msra.mxu0 0.0
        %1538 = vmatprep.subr.mxu0 0.0
        %1539 = vmatpush1.msra.mxu0 0.0
        %1540 = vmatprep.subr.mxu0 0.0
        %1541 = vmatpush1.msra.mxu0 0.0
        %1542 = vmatprep.subr.mxu0 0.0
        %1543 = vmatpush1.msra.mxu0 0.0
        %1544 = vmatprep.subr.mxu0 0.0
        %1545 = vmatpush1.msra.mxu0 0.0
        %1546 = vmatprep.subr.mxu0 0.0
        %1547 = vmatpush1.msra.mxu0 0.0
        %1548 = vmatprep.subr.mxu0 0.0
        %1549 = vmatpush1.msra.mxu0 0.0
        %1550 = vmatprep.subr.mxu0 0.0
        %1551 = vmatpush1.msra.mxu0 0.0
        %1552 = vmatprep.subr.mxu0 0.0
        %1553 = vmatpush1.msra.mxu0 0.0
        %1554 = vmatprep.subr.mxu0 0.0
        %1555 = vmatpush1.msra.mxu0 0.0
        %1556 = vmatprep.subr.mxu0 0.0
        %1557 = vmatpush1.msra.mxu0 0.0
        %1558 = vmatprep.subr.mxu0 0.0
        %1559 = vmatpush1.msra.mxu0 0.0
        %1560 = vmatprep.subr.mxu0 0.0
        %1561 = vmatpush1.msra.mxu0 0.0
        %1562 = vmatprep.subr.mxu0 0.0
        %1563 = vmatpush1.msra.mxu0 0.0
        %1564 = vmatprep.subr.mxu0 0.0
        %1565 = vmatpush1.msra.mxu0 0.0
        %1566 = vmatprep.subr.mxu0 0.0
        %1567 = vmatpush1.msra.mxu0 0.0
        %1568 = vmatprep.subr.mxu0 0.0
        %1569 = vmatpush1.msra.mxu0 0.0
        %1570 = vmatprep.subr.mxu0 0.0
        %1571 = vmatpush1.msra.mxu0 0.0
        %1572 = vmatprep.subr.mxu0 0.0
        %1573 = vmatpush1.msra.mxu0 0.0
        %1574 = vmatprep.subr.mxu0 0.0
        %1575 = vmatpush1.msra.mxu0 0.0
        %1576 = vmatprep.subr.mxu0 0.0
        %1577 = vmatpush1.msra.mxu0 0.0
        %1578 = vmatprep.subr.mxu0 0.0
        %1579 = vmatpush1.msra.mxu0 0.0
        %1580 = vmatprep.subr.mxu0 0.0
        %1581 = vmatpush1.msra.mxu0 0.0
        %1582 = vmatprep.subr.mxu0 0.0
        %1583 = vmatpush1.msra.mxu0 0.0
        %1584 = vmatprep.subr.mxu0 0.0
        %1585 = vmatpush1.msra.mxu0 0.0
        %1586 = vmatprep.subr.mxu0 0.0
        %1587 = vmatpush1.msra.mxu0 0.0
        %1588 = vmatprep.subr.mxu0 0.0
        %1589 = vmatpush1.msra.mxu0 0.0
        %1590 = vmatprep.subr.mxu0 0.0
        %1591 = vmatpush1.msra.mxu0 0.0
        %1592 = vmatprep.subr.mxu0 0.0
        %1593 = vmatpush1.msra.mxu0 0.0
        %1594 = vmatprep.subr.mxu0 0.0
        %1595 = vmatpush1.msra.mxu0 0.0
        %1596 = vmatprep.mubr.f32.mxu0 0.0
        %1597 = vmatmul.mubr.f32.gmra.mrb[0].mxu0 %v1530
        %v1598 = vpop.f32.mrb[0].mxu0
        %v1599 = vadd.f32 0.0, %v1598
        %v1600 = vpop.f32.mrb[0].mxu0
        %v1601 = vadd.f32 0.0, %v1600
        %1602 = vdwg.mxu0
        %v1603 = vadd.f32 %v1518, %v1599
        %v1604 = vadd.f32 %v1519, %v1601
        %s1605 = scalar_lea.vmem %s2, 56
        %v1606 = vld [vmem:[%s1605] sm:$0xff]
        %1607 = vrot.lane.b32.xlu0 %v1017, 95
        %v1608 = vpop.permute.xlu0 %1607
        %1609 = vrot.lane.b32.xlu0 %v1018, 95
        %v1610 = vpop.permute.xlu0 %1609
        %v1611 = vsel %vm845, %v1608, %v1610
        %v1615 = vsel %vm1031, %v1606, 0
        %1617 = vmatprep.subr.mxu0 %v1610
        %1618 = vmatpush1.msra.mxu0 %v1611
        %1619 = vmatprep.subr.mxu0 0.0
        %1620 = vmatpush1.msra.mxu0 0.0
        %1621 = vmatprep.subr.mxu0 0.0
        %1622 = vmatpush1.msra.mxu0 0.0
        %1623 = vmatprep.subr.mxu0 0.0
        %1624 = vmatpush1.msra.mxu0 0.0
        %1625 = vmatprep.subr.mxu0 0.0
        %1626 = vmatpush1.msra.mxu0 0.0
        %1627 = vmatprep.subr.mxu0 0.0
        %1628 = vmatpush1.msra.mxu0 0.0
        %1629 = vmatprep.subr.mxu0 0.0
        %1630 = vmatpush1.msra.mxu0 0.0
        %1631 = vmatprep.subr.mxu0 0.0
        %1632 = vmatpush1.msra.mxu0 0.0
        %1633 = vmatprep.subr.mxu0 0.0
        %1634 = vmatpush1.msra.mxu0 0.0
        %1635 = vmatprep.subr.mxu0 0.0
        %1636 = vmatpush1.msra.mxu0 0.0
        %1637 = vmatprep.subr.mxu0 0.0
        %1638 = vmatpush1.msra.mxu0 0.0
        %1639 = vmatprep.subr.mxu0 0.0
        %1640 = vmatpush1.msra.mxu0 0.0
        %1641 = vmatprep.subr.mxu0 0.0
        %1642 = vmatpush1.msra.mxu0 0.0
        %1643 = vmatprep.subr.mxu0 0.0
        %1644 = vmatpush1.msra.mxu0 0.0
        %1645 = vmatprep.subr.mxu0 0.0
        %1646 = vmatpush1.msra.mxu0 0.0
        %1647 = vmatprep.subr.mxu0 0.0
        %1648 = vmatpush1.msra.mxu0 0.0
        %1649 = vmatprep.subr.mxu0 0.0
        %1650 = vmatpush1.msra.mxu0 0.0
        %1651 = vmatprep.subr.mxu0 0.0
        %1652 = vmatpush1.msra.mxu0 0.0
        %1653 = vmatprep.subr.mxu0 0.0
        %1654 = vmatpush1.msra.mxu0 0.0
        %1655 = vmatprep.subr.mxu0 0.0
        %1656 = vmatpush1.msra.mxu0 0.0
        %1657 = vmatprep.subr.mxu0 0.0
        %1658 = vmatpush1.msra.mxu0 0.0
        %1659 = vmatprep.subr.mxu0 0.0
        %1660 = vmatpush1.msra.mxu0 0.0
        %1661 = vmatprep.subr.mxu0 0.0
        %1662 = vmatpush1.msra.mxu0 0.0
        %1663 = vmatprep.subr.mxu0 0.0
        %1664 = vmatpush1.msra.mxu0 0.0
        %1665 = vmatprep.subr.mxu0 0.0
        %1666 = vmatpush1.msra.mxu0 0.0
        %1667 = vmatprep.subr.mxu0 0.0
        %1668 = vmatpush1.msra.mxu0 0.0
        %1669 = vmatprep.subr.mxu0 0.0
        %1670 = vmatpush1.msra.mxu0 0.0
        %1671 = vmatprep.subr.mxu0 0.0
        %1672 = vmatpush1.msra.mxu0 0.0
        %1673 = vmatprep.subr.mxu0 0.0
        %1674 = vmatpush1.msra.mxu0 0.0
        %1675 = vmatprep.subr.mxu0 0.0
        %1676 = vmatpush1.msra.mxu0 0.0
        %1677 = vmatprep.subr.mxu0 0.0
        %1678 = vmatpush1.msra.mxu0 0.0
        %1679 = vmatprep.subr.mxu0 0.0
        %1680 = vmatpush1.msra.mxu0 0.0
        %1681 = vmatprep.mubr.f32.mxu0 0.0
        %1682 = vmatmul.mubr.f32.gmra.mrb[0].mxu0 %v1615
        %v1683 = vpop.f32.mrb[0].mxu0
        %v1684 = vadd.f32 0.0, %v1683
        %v1685 = vpop.f32.mrb[0].mxu0
        %v1686 = vadd.f32 0.0, %v1685
        %1687 = vdwg.mxu0
        %v1688 = vadd.f32 %v1603, %v1684
        %v1689 = vadd.f32 %v1604, %v1686
        %s1690 = scalar_lea.vmem %s2, 64
        %v1691 = vld [vmem:[%s1690] sm:$0xff]
        %1692 = vrot.lane.b32.xlu0 %v1017, 94
        %v1693 = vpop.permute.xlu0 %1692
        %1694 = vrot.lane.b32.xlu0 %v1018, 94
        %v1695 = vpop.permute.xlu0 %1694
        %v1696 = vsel %vm936, %v1693, %v1695
        %v1700 = vsel %vm1031, %v1691, 0
        %1702 = vmatprep.subr.mxu0 %v1695
        %1703 = vmatpush1.msra.mxu0 %v1696
        %1704 = vmatprep.subr.mxu0 0.0
        %1705 = vmatpush1.msra.mxu0 0.0
        %1706 = vmatprep.subr.mxu0 0.0
        %1707 = vmatpush1.msra.mxu0 0.0
        %1708 = vmatprep.subr.mxu0 0.0
        %1709 = vmatpush1.msra.mxu0 0.0
        %1710 = vmatprep.subr.mxu0 0.0
        %1711 = vmatpush1.msra.mxu0 0.0
        %1712 = vmatprep.subr.mxu0 0.0
        %1713 = vmatpush1.msra.mxu0 0.0
        %1714 = vmatprep.subr.mxu0 0.0
        %1715 = vmatpush1.msra.mxu0 0.0
        %1716 = vmatprep.subr.mxu0 0.0
        %1717 = vmatpush1.msra.mxu0 0.0
        %1718 = vmatprep.subr.mxu0 0.0
        %1719 = vmatpush1.msra.mxu0 0.0
        %1720 = vmatprep.subr.mxu0 0.0
        %1721 = vmatpush1.msra.mxu0 0.0
        %1722 = vmatprep.subr.mxu0 0.0
        %1723 = vmatpush1.msra.mxu0 0.0
        %1724 = vmatprep.subr.mxu0 0.0
        %1725 = vmatpush1.msra.mxu0 0.0
        %1726 = vmatprep.subr.mxu0 0.0
        %1727 = vmatpush1.msra.mxu0 0.0
        %1728 = vmatprep.subr.mxu0 0.0
        %1729 = vmatpush1.msra.mxu0 0.0
        %1730 = vmatprep.subr.mxu0 0.0
        %1731 = vmatpush1.msra.mxu0 0.0
        %1732 = vmatprep.subr.mxu0 0.0
        %1733 = vmatpush1.msra.mxu0 0.0
        %1734 = vmatprep.subr.mxu0 0.0
        %1735 = vmatpush1.msra.mxu0 0.0
        %1736 = vmatprep.subr.mxu0 0.0
        %1737 = vmatpush1.msra.mxu0 0.0
        %1738 = vmatprep.subr.mxu0 0.0
        %1739 = vmatpush1.msra.mxu0 0.0
        %1740 = vmatprep.subr.mxu0 0.0
        %1741 = vmatpush1.msra.mxu0 0.0
        %1742 = vmatprep.subr.mxu0 0.0
        %1743 = vmatpush1.msra.mxu0 0.0
        %1744 = vmatprep.subr.mxu0 0.0
        %1745 = vmatpush1.msra.mxu0 0.0
        %1746 = vmatprep.subr.mxu0 0.0
        %1747 = vmatpush1.msra.mxu0 0.0
        %1748 = vmatprep.subr.mxu0 0.0
        %1749 = vmatpush1.msra.mxu0 0.0
        %1750 = vmatprep.subr.mxu0 0.0
        %1751 = vmatpush1.msra.mxu0 0.0
        %1752 = vmatprep.subr.mxu0 0.0
        %1753 = vmatpush1.msra.mxu0 0.0
        %1754 = vmatprep.subr.mxu0 0.0
        %1755 = vmatpush1.msra.mxu0 0.0
        %1756 = vmatprep.subr.mxu0 0.0
        %1757 = vmatpush1.msra.mxu0 0.0
        %1758 = vmatprep.subr.mxu0 0.0
        %1759 = vmatpush1.msra.mxu0 0.0
        %1760 = vmatprep.subr.mxu0 0.0
        %1761 = vmatpush1.msra.mxu0 0.0
        %1762 = vmatprep.subr.mxu0 0.0
        %1763 = vmatpush1.msra.mxu0 0.0
        %1764 = vmatprep.subr.mxu0 0.0
        %1765 = vmatpush1.msra.mxu0 0.0
        %1766 = vmatprep.mubr.f32.mxu0 0.0
        %1767 = vmatmul.mubr.f32.gmra.mrb[0].mxu0 %v1700
        %v1768 = vpop.f32.mrb[0].mxu0
        %v1769 = vadd.f32 0.0, %v1768
        %v1770 = vpop.f32.mrb[0].mxu0
        %v1771 = vadd.f32 0.0, %v1770
        %1772 = vdwg.mxu0
        %v1773 = vadd.f32 %v1688, %v1769
        %v1774 = vadd.f32 %v1689, %v1771
        %v1775 = vld [vmem:[%s3] sm:$0xff]
        %v1776 = vld [vmem:[%s3 + $0x8] sm:$0xff]
        %v1777 = vld [vmem:[%s3 + $0x10] sm:$0xff]
        %v1778 = vld [vmem:[%s3 + $0x18] sm:$0xff]
        %v1779 = vld [vmem:[%s3 + $0x20] sm:$0xff]
        %v1780 = vld [vmem:[%s3 + $0x28] sm:$0xff]
        %v1781 = vld [vmem:[%s3 + $0x30] sm:$0xff]
        %v1782 = vld [vmem:[%s3 + $0x38] sm:$0xff]
        %v1783 = vld [vmem:[%s3 + $0x40] sm:$0xff]
        %v1784 = vld [vmem:[%s3 + $0x48] sm:$0xff]
        %v1785 = vld [vmem:[%s3 + $0x50] sm:$0xff]
        %v1786 = vld [vmem:[%s3 + $0x58] sm:$0xff]
        %v1787 = vld [vmem:[%s3 + $0x60] sm:$0xff]
        %v1788 = vld [vmem:[%s3 + $0x68] sm:$0xff]
        %v1789 = vld [vmem:[%s3 + $0x70] sm:$0xff]
        %v1790 = vld [vmem:[%s3 + $0x78] sm:$0xff]
        %v1791 = vld [vmem:[%s3 + $0x80] sm:$0xff]
        %v1792 = vld [vmem:[%s3 + $0x88] sm:$0xff]
        %v1793 = vld [vmem:[%s3 + $0x90] sm:$0xff]
        %v1794 = vld [vmem:[%s3 + $0x98] sm:$0xff]
        %v1795 = vld [vmem:[%s3 + $0xa0] sm:$0xff]
        %v1796 = vld [vmem:[%s3 + $0xa8] sm:$0xff]
        %v1797 = vld [vmem:[%s3 + $0xb0] sm:$0xff]
        %v1798 = vld [vmem:[%s3 + $0xb8] sm:$0xff]
        %vm1799 = vcmask 523264
        %v1801 = vsel %vm1799, %v1774, 0
        %1803 = vmatprep.subr.mxu0 0.0
        %1804 = vmatpush1.msra.mxu0 %v1775
        %1805 = vmatprep.subr.mxu0 0.0
        %1806 = vmatpush1.msra.mxu0 %v1776
        %1807 = vmatprep.subr.mxu0 0.0
        %1808 = vmatpush1.msra.mxu0 %v1777
        %1809 = vmatprep.subr.mxu0 0.0
        %1810 = vmatpush1.msra.mxu0 %v1778
        %1811 = vmatprep.subr.mxu0 0.0
        %1812 = vmatpush1.msra.mxu0 %v1779
        %1813 = vmatprep.subr.mxu0 0.0
        %1814 = vmatpush1.msra.mxu0 %v1780
        %1815 = vmatprep.subr.mxu0 0.0
        %1816 = vmatpush1.msra.mxu0 %v1781
        %1817 = vmatprep.subr.mxu0 0.0
        %1818 = vmatpush1.msra.mxu0 %v1782
        %1819 = vmatprep.subr.mxu0 0.0
        %1820 = vmatpush1.msra.mxu0 %v1783
        %1821 = vmatprep.subr.mxu0 0.0
        %1822 = vmatpush1.msra.mxu0 %v1784
        %1823 = vmatprep.subr.mxu0 0.0
        %1824 = vmatpush1.msra.mxu0 %v1785
        %1825 = vmatprep.subr.mxu0 0.0
        %1826 = vmatpush1.msra.mxu0 %v1786
        %1827 = vmatprep.subr.mxu0 0.0
        %1828 = vmatpush1.msra.mxu0 %v1787
        %1829 = vmatprep.subr.mxu0 0.0
        %1830 = vmatpush1.msra.mxu0 %v1788
        %1831 = vmatprep.subr.mxu0 0.0
        %1832 = vmatpush1.msra.mxu0 %v1789
        %1833 = vmatprep.subr.mxu0 0.0
        %1834 = vmatpush1.msra.mxu0 %v1790
        %1835 = vmatprep.subr.mxu0 0.0
        %1836 = vmatpush1.msra.mxu0 %v1791
        %1837 = vmatprep.subr.mxu0 0.0
        %1838 = vmatpush1.msra.mxu0 %v1792
        %1839 = vmatprep.subr.mxu0 0.0
        %1840 = vmatpush1.msra.mxu0 %v1793
        %1841 = vmatprep.subr.mxu0 0.0
        %1842 = vmatpush1.msra.mxu0 %v1794
        %1843 = vmatprep.subr.mxu0 0.0
        %1844 = vmatpush1.msra.mxu0 %v1795
        %1845 = vmatprep.subr.mxu0 0.0
        %1846 = vmatpush1.msra.mxu0 %v1796
        %1847 = vmatprep.subr.mxu0 0.0
        %1848 = vmatpush1.msra.mxu0 %v1797
        %1849 = vmatprep.subr.mxu0 0.0
        %1850 = vmatpush1.msra.mxu0 %v1798
        %1851 = vmatprep.subr.mxu0 0.0
        %1852 = vmatpush1.msra.mxu0 0.0
        %1853 = vmatprep.subr.mxu0 0.0
        %1854 = vmatpush1.msra.mxu0 0.0
        %1855 = vmatprep.subr.mxu0 0.0
        %1856 = vmatpush1.msra.mxu0 0.0
        %1857 = vmatprep.subr.mxu0 0.0
        %1858 = vmatpush1.msra.mxu0 0.0
        %1859 = vmatprep.subr.mxu0 0.0
        %1860 = vmatpush1.msra.mxu0 0.0
        %1861 = vmatprep.subr.mxu0 0.0
        %1862 = vmatpush1.msra.mxu0 0.0
        %1863 = vmatprep.subr.mxu0 0.0
        %1864 = vmatpush1.msra.mxu0 0.0
        %1865 = vmatprep.subr.mxu0 0.0
        %1866 = vmatpush1.msra.mxu0 0.0
        %1867 = vmatprep.mubr.f32.mxu0 %v1801
        %1868 = vmatmul.mubr.f32.gmra.mrb[0].mxu0 %v1773
        %v1869 = vpop.f32.mrb[0].mxu0
        %v1870 = vadd.f32 0.0, %v1869
        %v1871 = vpop.f32.mrb[0].mxu0
        %1872 = vdwg.mxu0
        %v1873 = vld [vmem:[%s4] sm:$0xff]
        %v1874 = vld [vmem:[%s4 + $0x8] sm:$0xff]
        %v1875 = vld [vmem:[%s4 + $0x10] sm:$0xff]
        %v1876 = vld [vmem:[%s4 + $0x18] sm:$0x1]
        %s1877 = scalar_lea.vmem %s4, 32
        %v1878 = vld [vmem:[%s1877] sm:$0xff]
        %v1879 = vld [vmem:[%s1877 + $0x8] sm:$0xff]
        %v1880 = vld [vmem:[%s1877 + $0x10] sm:$0xff]
        %v1881 = vld [vmem:[%s1877 + $0x18] sm:$0x1]
        %v1883 = vrot.slane %v1870, 1
        %vm1884 = vcmask 203776
        %v1885 = vsel %vm1884, %v1883, 0
        %vm1887 = vcmask 1040384
        %v1889 = vsel %vm1887, %v1881, 0
        %1891 = vmatprep.subr.mxu0 0.0
        %1892 = vmatpush1.msra.mxu0 %v1878
        %1893 = vmatprep.subr.mxu0 0.0
        %1894 = vmatpush1.msra.mxu0 %v1879
        %1895 = vmatprep.subr.mxu0 0.0
        %1896 = vmatpush1.msra.mxu0 %v1880
        %1897 = vmatprep.subr.mxu0 0.0
        %1898 = vmatpush1.msra.mxu0 %v1889
        %1899 = vmatprep.subr.mxu0 0.0
        %1900 = vmatpush1.msra.mxu0 0.0
        %1901 = vmatprep.subr.mxu0 0.0
        %1902 = vmatpush1.msra.mxu0 0.0
        %1903 = vmatprep.subr.mxu0 0.0
        %1904 = vmatpush1.msra.mxu0 0.0
        %1905 = vmatprep.subr.mxu0 0.0
        %1906 = vmatpush1.msra.mxu0 0.0
        %1907 = vmatprep.subr.mxu0 0.0
        %1908 = vmatpush1.msra.mxu0 0.0
        %1909 = vmatprep.subr.mxu0 0.0
        %1910 = vmatpush1.msra.mxu0 0.0
        %1911 = vmatprep.subr.mxu0 0.0
        %1912 = vmatpush1.msra.mxu0 0.0
        %1913 = vmatprep.subr.mxu0 0.0
        %1914 = vmatpush1.msra.mxu0 0.0
        %1915 = vmatprep.subr.mxu0 0.0
        %1916 = vmatpush1.msra.mxu0 0.0
        %1917 = vmatprep.subr.mxu0 0.0
        %1918 = vmatpush1.msra.mxu0 0.0
        %1919 = vmatprep.subr.mxu0 0.0
        %1920 = vmatpush1.msra.mxu0 0.0
        %1921 = vmatprep.subr.mxu0 0.0
        %1922 = vmatpush1.msra.mxu0 0.0
        %1923 = vmatprep.subr.mxu0 0.0
        %1924 = vmatpush1.msra.mxu0 0.0
        %1925 = vmatprep.subr.mxu0 0.0
        %1926 = vmatpush1.msra.mxu0 0.0
        %1927 = vmatprep.subr.mxu0 0.0
        %1928 = vmatpush1.msra.mxu0 0.0
        %1929 = vmatprep.subr.mxu0 0.0
        %1930 = vmatpush1.msra.mxu0 0.0
        %1931 = vmatprep.subr.mxu0 0.0
        %1932 = vmatpush1.msra.mxu0 0.0
        %1933 = vmatprep.subr.mxu0 0.0
        %1934 = vmatpush1.msra.mxu0 0.0
        %1935 = vmatprep.subr.mxu0 0.0
        %1936 = vmatpush1.msra.mxu0 0.0
        %1937 = vmatprep.subr.mxu0 0.0
        %1938 = vmatpush1.msra.mxu0 0.0
        %1939 = vmatprep.subr.mxu0 0.0
        %1940 = vmatpush1.msra.mxu0 0.0
        %1941 = vmatprep.subr.mxu0 0.0
        %1942 = vmatpush1.msra.mxu0 0.0
        %1943 = vmatprep.subr.mxu0 0.0
        %1944 = vmatpush1.msra.mxu0 0.0
        %1945 = vmatprep.subr.mxu0 0.0
        %1946 = vmatpush1.msra.mxu0 0.0
        %1947 = vmatprep.subr.mxu0 0.0
        %1948 = vmatpush1.msra.mxu0 0.0
        %1949 = vmatprep.subr.mxu0 0.0
        %1950 = vmatpush1.msra.mxu0 0.0
        %1951 = vmatprep.subr.mxu0 0.0
        %1952 = vmatpush1.msra.mxu0 0.0
        %1953 = vmatprep.subr.mxu0 0.0
        %1954 = vmatpush1.msra.mxu0 0.0
        %1955 = vmatprep.mubr.f32.mxu0 0.0
        %1956 = vmatmul.mubr.f32.gmra.mrb[0].mxu0 %v1885
        %v1957 = vpop.f32.mrb[0].mxu0
        %v1958 = vadd.f32 0.0, %v1957
        %v1959 = vpop.f32.mrb[0].mxu0
        %1960 = vdwg.mxu0
        %v1961 = vsel %vm1884, %v1870, 0
        %v1964 = vsel %vm1887, %v1876, 0
        %1966 = vmatprep.subr.mxu0 0.0
        %1967 = vmatpush1.msra.mxu0 %v1873
        %1968 = vmatprep.subr.mxu0 0.0
        %1969 = vmatpush1.msra.mxu0 %v1874
        %1970 = vmatprep.subr.mxu0 0.0
        %1971 = vmatpush1.msra.mxu0 %v1875
        %1972 = vmatprep.subr.mxu0 0.0
        %1973 = vmatpush1.msra.mxu0 %v1964
        %1974 = vmatprep.subr.mxu0 0.0
        %1975 = vmatpush1.msra.mxu0 0.0
        %1976 = vmatprep.subr.mxu0 0.0
        %1977 = vmatpush1.msra.mxu0 0.0
        %1978 = vmatprep.subr.mxu0 0.0
        %1979 = vmatpush1.msra.mxu0 0.0
        %1980 = vmatprep.subr.mxu0 0.0
        %1981 = vmatpush1.msra.mxu0 0.0
        %1982 = vmatprep.subr.mxu0 0.0
        %1983 = vmatpush1.msra.mxu0 0.0
        %1984 = vmatprep.subr.mxu0 0.0
        %1985 = vmatpush1.msra.mxu0 0.0
        %1986 = vmatprep.subr.mxu0 0.0
        %1987 = vmatpush1.msra.mxu0 0.0
        %1988 = vmatprep.subr.mxu0 0.0
        %1989 = vmatpush1.msra.mxu0 0.0
        %1990 = vmatprep.subr.mxu0 0.0
        %1991 = vmatpush1.msra.mxu0 0.0
        %1992 = vmatprep.subr.mxu0 0.0
        %1993 = vmatpush1.msra.mxu0 0.0
        %1994 = vmatprep.subr.mxu0 0.0
        %1995 = vmatpush1.msra.mxu0 0.0
        %1996 = vmatprep.subr.mxu0 0.0
        %1997 = vmatpush1.msra.mxu0 0.0
        %1998 = vmatprep.subr.mxu0 0.0
        %1999 = vmatpush1.msra.mxu0 0.0
        %2000 = vmatprep.subr.mxu0 0.0
        %2001 = vmatpush1.msra.mxu0 0.0
        %2002 = vmatprep.subr.mxu0 0.0
        %2003 = vmatpush1.msra.mxu0 0.0
        %2004 = vmatprep.subr.mxu0 0.0
        %2005 = vmatpush1.msra.mxu0 0.0
        %2006 = vmatprep.subr.mxu0 0.0
        %2007 = vmatpush1.msra.mxu0 0.0
        %2008 = vmatprep.subr.mxu0 0.0
        %2009 = vmatpush1.msra.mxu0 0.0
        %2010 = vmatprep.subr.mxu0 0.0
        %2011 = vmatpush1.msra.mxu0 0.0
        %2012 = vmatprep.subr.mxu0 0.0
        %2013 = vmatpush1.msra.mxu0 0.0
        %2014 = vmatprep.subr.mxu0 0.0
        %2015 = vmatpush1.msra.mxu0 0.0
        %2016 = vmatprep.subr.mxu0 0.0
        %2017 = vmatpush1.msra.mxu0 0.0
        %2018 = vmatprep.subr.mxu0 0.0
        %2019 = vmatpush1.msra.mxu0 0.0
        %2020 = vmatprep.subr.mxu0 0.0
        %2021 = vmatpush1.msra.mxu0 0.0
        %2022 = vmatprep.subr.mxu0 0.0
        %2023 = vmatpush1.msra.mxu0 0.0
        %2024 = vmatprep.subr.mxu0 0.0
        %2025 = vmatpush1.msra.mxu0 0.0
        %2026 = vmatprep.subr.mxu0 0.0
        %2027 = vmatpush1.msra.mxu0 0.0
        %2028 = vmatprep.subr.mxu0 0.0
        %2029 = vmatpush1.msra.mxu0 0.0
        %2030 = vmatprep.mubr.f32.mxu0 0.0
        %2031 = vmatmul.mubr.f32.gmra.mrb[0].mxu0 %v1961
        %v2032 = vpop.f32.mrb[0].mxu0
        %v2033 = vadd.f32 %v1958, %v2032
        %v2034 = vpop.f32.mrb[0].mxu0
        %2035 = vdwg.mxu0
        %s2036 = scalar_lea.vmem %s4, 64
        %v2037 = vld [vmem:[%s2036] sm:$0xff]
        %v2038 = vld [vmem:[%s2036 + $0x8] sm:$0xff]
        %v2039 = vld [vmem:[%s2036 + $0x10] sm:$0xff]
        %v2040 = vld [vmem:[%s2036 + $0x18] sm:$0x1]
        %v2041 = vrot.slane %v1870, 2
        %v2042 = vsel %vm1884, %v2041, 0
        %v2045 = vsel %vm1887, %v2040, 0
        %2047 = vmatprep.subr.mxu0 0.0
        %2048 = vmatpush1.msra.mxu0 %v2037
        %2049 = vmatprep.subr.mxu0 0.0
        %2050 = vmatpush1.msra.mxu0 %v2038
        %2051 = vmatprep.subr.mxu0 0.0
        %2052 = vmatpush1.msra.mxu0 %v2039
        %2053 = vmatprep.subr.mxu0 0.0
        %2054 = vmatpush1.msra.mxu0 %v2045
        %2055 = vmatprep.subr.mxu0 0.0
        %2056 = vmatpush1.msra.mxu0 0.0
        %2057 = vmatprep.subr.mxu0 0.0
        %2058 = vmatpush1.msra.mxu0 0.0
        %2059 = vmatprep.subr.mxu0 0.0
        %2060 = vmatpush1.msra.mxu0 0.0
        %2061 = vmatprep.subr.mxu0 0.0
        %2062 = vmatpush1.msra.mxu0 0.0
        %2063 = vmatprep.subr.mxu0 0.0
        %2064 = vmatpush1.msra.mxu0 0.0
        %2065 = vmatprep.subr.mxu0 0.0
        %2066 = vmatpush1.msra.mxu0 0.0
        %2067 = vmatprep.subr.mxu0 0.0
        %2068 = vmatpush1.msra.mxu0 0.0
        %2069 = vmatprep.subr.mxu0 0.0
        %2070 = vmatpush1.msra.mxu0 0.0
        %2071 = vmatprep.subr.mxu0 0.0
        %2072 = vmatpush1.msra.mxu0 0.0
        %2073 = vmatprep.subr.mxu0 0.0
        %2074 = vmatpush1.msra.mxu0 0.0
        %2075 = vmatprep.subr.mxu0 0.0
        %2076 = vmatpush1.msra.mxu0 0.0
        %2077 = vmatprep.subr.mxu0 0.0
        %2078 = vmatpush1.msra.mxu0 0.0
        %2079 = vmatprep.subr.mxu0 0.0
        %2080 = vmatpush1.msra.mxu0 0.0
        %2081 = vmatprep.subr.mxu0 0.0
        %2082 = vmatpush1.msra.mxu0 0.0
        %2083 = vmatprep.subr.mxu0 0.0
        %2084 = vmatpush1.msra.mxu0 0.0
        %2085 = vmatprep.subr.mxu0 0.0
        %2086 = vmatpush1.msra.mxu0 0.0
        %2087 = vmatprep.subr.mxu0 0.0
        %2088 = vmatpush1.msra.mxu0 0.0
        %2089 = vmatprep.subr.mxu0 0.0
        %2090 = vmatpush1.msra.mxu0 0.0
        %2091 = vmatprep.subr.mxu0 0.0
        %2092 = vmatpush1.msra.mxu0 0.0
        %2093 = vmatprep.subr.mxu0 0.0
        %2094 = vmatpush1.msra.mxu0 0.0
        %2095 = vmatprep.subr.mxu0 0.0
        %2096 = vmatpush1.msra.mxu0 0.0
        %2097 = vmatprep.subr.mxu0 0.0
        %2098 = vmatpush1.msra.mxu0 0.0
        %2099 = vmatprep.subr.mxu0 0.0
        %2100 = vmatpush1.msra.mxu0 0.0
        %2101 = vmatprep.subr.mxu0 0.0
        %2102 = vmatpush1.msra.mxu0 0.0
        %2103 = vmatprep.subr.mxu0 0.0
        %2104 = vmatpush1.msra.mxu0 0.0
        %2105 = vmatprep.subr.mxu0 0.0
        %2106 = vmatpush1.msra.mxu0 0.0
        %2107 = vmatprep.subr.mxu0 0.0
        %2108 = vmatpush1.msra.mxu0 0.0
        %2109 = vmatprep.subr.mxu0 0.0
        %2110 = vmatpush1.msra.mxu0 0.0
        %2111 = vmatprep.mubr.f32.mxu0 0.0
        %2112 = vmatmul.mubr.f32.gmra.mrb[0].mxu0 %v2042
        %v2113 = vpop.f32.mrb[0].mxu0
        %v2114 = vadd.f32 0.0, %v2113
        %v2115 = vpop.f32.mrb[0].mxu0
        %2116 = vdwg.mxu0
        %v2117 = vadd.f32 %v2033, %v2114
        %s2118 = scalar_lea.vmem %s4, 96
        %v2119 = vld [vmem:[%s2118] sm:$0xff]
        %v2120 = vld [vmem:[%s2118 + $0x8] sm:$0xff]
        %v2121 = vld [vmem:[%s2118 + $0x10] sm:$0xff]
        %v2122 = vld [vmem:[%s2118 + $0x18] sm:$0x1]
        %v2123 = vrot.slane %v1870, 3
        %v2124 = vsel %vm1884, %v2123, 0
        %v2127 = vsel %vm1887, %v2122, 0
        %2129 = vmatprep.subr.mxu0 0.0
        %2130 = vmatpush1.msra.mxu0 %v2119
        %2131 = vmatprep.subr.mxu0 0.0
        %2132 = vmatpush1.msra.mxu0 %v2120
        %2133 = vmatprep.subr.mxu0 0.0
        %2134 = vmatpush1.msra.mxu0 %v2121
        %2135 = vmatprep.subr.mxu0 0.0
        %2136 = vmatpush1.msra.mxu0 %v2127
        %2137 = vmatprep.subr.mxu0 0.0
        %2138 = vmatpush1.msra.mxu0 0.0
        %2139 = vmatprep.subr.mxu0 0.0
        %2140 = vmatpush1.msra.mxu0 0.0
        %2141 = vmatprep.subr.mxu0 0.0
        %2142 = vmatpush1.msra.mxu0 0.0
        %2143 = vmatprep.subr.mxu0 0.0
        %2144 = vmatpush1.msra.mxu0 0.0
        %2145 = vmatprep.subr.mxu0 0.0
        %2146 = vmatpush1.msra.mxu0 0.0
        %2147 = vmatprep.subr.mxu0 0.0
        %2148 = vmatpush1.msra.mxu0 0.0
        %2149 = vmatprep.subr.mxu0 0.0
        %2150 = vmatpush1.msra.mxu0 0.0
        %2151 = vmatprep.subr.mxu0 0.0
        %2152 = vmatpush1.msra.mxu0 0.0
        %2153 = vmatprep.subr.mxu0 0.0
        %2154 = vmatpush1.msra.mxu0 0.0
        %2155 = vmatprep.subr.mxu0 0.0
        %2156 = vmatpush1.msra.mxu0 0.0
        %2157 = vmatprep.subr.mxu0 0.0
        %2158 = vmatpush1.msra.mxu0 0.0
        %2159 = vmatprep.subr.mxu0 0.0
        %2160 = vmatpush1.msra.mxu0 0.0
        %2161 = vmatprep.subr.mxu0 0.0
        %2162 = vmatpush1.msra.mxu0 0.0
        %2163 = vmatprep.subr.mxu0 0.0
        %2164 = vmatpush1.msra.mxu0 0.0
        %2165 = vmatprep.subr.mxu0 0.0
        %2166 = vmatpush1.msra.mxu0 0.0
        %2167 = vmatprep.subr.mxu0 0.0
        %2168 = vmatpush1.msra.mxu0 0.0
        %2169 = vmatprep.subr.mxu0 0.0
        %2170 = vmatpush1.msra.mxu0 0.0
        %2171 = vmatprep.subr.mxu0 0.0
        %2172 = vmatpush1.msra.mxu0 0.0
        %2173 = vmatprep.subr.mxu0 0.0
        %2174 = vmatpush1.msra.mxu0 0.0
        %2175 = vmatprep.subr.mxu0 0.0
        %2176 = vmatpush1.msra.mxu0 0.0
        %2177 = vmatprep.subr.mxu0 0.0
        %2178 = vmatpush1.msra.mxu0 0.0
        %2179 = vmatprep.subr.mxu0 0.0
        %2180 = vmatpush1.msra.mxu0 0.0
        %2181 = vmatprep.subr.mxu0 0.0
        %2182 = vmatpush1.msra.mxu0 0.0
        %2183 = vmatprep.subr.mxu0 0.0
        %2184 = vmatpush1.msra.mxu0 0.0
        %2185 = vmatprep.subr.mxu0 0.0
        %2186 = vmatpush1.msra.mxu0 0.0
        %2187 = vmatprep.subr.mxu0 0.0
        %2188 = vmatpush1.msra.mxu0 0.0
        %2189 = vmatprep.subr.mxu0 0.0
        %2190 = vmatpush1.msra.mxu0 0.0
        %2191 = vmatprep.subr.mxu0 0.0
        %2192 = vmatpush1.msra.mxu0 0.0
        %2193 = vmatprep.mubr.f32.mxu0 0.0
        %2194 = vmatmul.mubr.f32.gmra.mrb[0].mxu0 %v2124
        %v2195 = vpop.f32.mrb[0].mxu0
        %v2196 = vadd.f32 0.0, %v2195
        %v2197 = vpop.f32.mrb[0].mxu0
        %2198 = vdwg.mxu0
        %v2199 = vadd.f32 %v2117, %v2196
        %s2200 = scalar_lea.vmem %s4, 128
        %v2201 = vld [vmem:[%s2200] sm:$0xff]
        %v2202 = vld [vmem:[%s2200 + $0x8] sm:$0xff]
        %v2203 = vld [vmem:[%s2200 + $0x10] sm:$0xff]
        %v2204 = vld [vmem:[%s2200 + $0x18] sm:$0x1]
        %v2205 = vrot.slane %v1870, 4
        %v2206 = vsel %vm1884, %v2205, 0
        %v2209 = vsel %vm1887, %v2204, 0
        %2211 = vmatprep.subr.mxu0 0.0
        %2212 = vmatpush1.msra.mxu0 %v2201
        %2213 = vmatprep.subr.mxu0 0.0
        %2214 = vmatpush1.msra.mxu0 %v2202
        %2215 = vmatprep.subr.mxu0 0.0
        %2216 = vmatpush1.msra.mxu0 %v2203
        %2217 = vmatprep.subr.mxu0 0.0
        %2218 = vmatpush1.msra.mxu0 %v2209
        %2219 = vmatprep.subr.mxu0 0.0
        %2220 = vmatpush1.msra.mxu0 0.0
        %2221 = vmatprep.subr.mxu0 0.0
        %2222 = vmatpush1.msra.mxu0 0.0
        %2223 = vmatprep.subr.mxu0 0.0
        %2224 = vmatpush1.msra.mxu0 0.0
        %2225 = vmatprep.subr.mxu0 0.0
        %2226 = vmatpush1.msra.mxu0 0.0
        %2227 = vmatprep.subr.mxu0 0.0
        %2228 = vmatpush1.msra.mxu0 0.0
        %2229 = vmatprep.subr.mxu0 0.0
        %2230 = vmatpush1.msra.mxu0 0.0
        %2231 = vmatprep.subr.mxu0 0.0
        %2232 = vmatpush1.msra.mxu0 0.0
        %2233 = vmatprep.subr.mxu0 0.0
        %2234 = vmatpush1.msra.mxu0 0.0
        %2235 = vmatprep.subr.mxu0 0.0
        %2236 = vmatpush1.msra.mxu0 0.0
        %2237 = vmatprep.subr.mxu0 0.0
        %2238 = vmatpush1.msra.mxu0 0.0
        %2239 = vmatprep.subr.mxu0 0.0
        %2240 = vmatpush1.msra.mxu0 0.0
        %2241 = vmatprep.subr.mxu0 0.0
        %2242 = vmatpush1.msra.mxu0 0.0
        %2243 = vmatprep.subr.mxu0 0.0
        %2244 = vmatpush1.msra.mxu0 0.0
        %2245 = vmatprep.subr.mxu0 0.0
        %2246 = vmatpush1.msra.mxu0 0.0
        %2247 = vmatprep.subr.mxu0 0.0
        %2248 = vmatpush1.msra.mxu0 0.0
        %2249 = vmatprep.subr.mxu0 0.0
        %2250 = vmatpush1.msra.mxu0 0.0
        %2251 = vmatprep.subr.mxu0 0.0
        %2252 = vmatpush1.msra.mxu0 0.0
        %2253 = vmatprep.subr.mxu0 0.0
        %2254 = vmatpush1.msra.mxu0 0.0
        %2255 = vmatprep.subr.mxu0 0.0
        %2256 = vmatpush1.msra.mxu0 0.0
        %2257 = vmatprep.subr.mxu0 0.0
        %2258 = vmatpush1.msra.mxu0 0.0
        %2259 = vmatprep.subr.mxu0 0.0
        %2260 = vmatpush1.msra.mxu0 0.0
        %2261 = vmatprep.subr.mxu0 0.0
        %2262 = vmatpush1.msra.mxu0 0.0
        %2263 = vmatprep.subr.mxu0 0.0
        %2264 = vmatpush1.msra.mxu0 0.0
        %2265 = vmatprep.subr.mxu0 0.0
        %2266 = vmatpush1.msra.mxu0 0.0
        %2267 = vmatprep.subr.mxu0 0.0
        %2268 = vmatpush1.msra.mxu0 0.0
        %2269 = vmatprep.subr.mxu0 0.0
        %2270 = vmatpush1.msra.mxu0 0.0
        %2271 = vmatprep.subr.mxu0 0.0
        %2272 = vmatpush1.msra.mxu0 0.0
        %2273 = vmatprep.subr.mxu0 0.0
        %2274 = vmatpush1.msra.mxu0 0.0
        %2275 = vmatprep.mubr.f32.mxu0 0.0
        %2276 = vmatmul.mubr.f32.gmra.mrb[0].mxu0 %v2206
        %v2277 = vpop.f32.mrb[0].mxu0
        %v2278 = vadd.f32 0.0, %v2277
        %v2279 = vpop.f32.mrb[0].mxu0
        %2280 = vdwg.mxu0
        %v2281 = vadd.f32 %v2199, %v2278
        %s2282 = scalar_lea.vmem %s4, 160
        %v2283 = vld [vmem:[%s2282] sm:$0xff]
        %v2284 = vld [vmem:[%s2282 + $0x8] sm:$0xff]
        %v2285 = vld [vmem:[%s2282 + $0x10] sm:$0xff]
        %v2286 = vld [vmem:[%s2282 + $0x18] sm:$0x1]
        %v2287 = vrot.slane %v1870, 5
        %v2288 = vsel %vm1884, %v2287, 0
        %v2291 = vsel %vm1887, %v2286, 0
        %2293 = vmatprep.subr.mxu0 0.0
        %2294 = vmatpush1.msra.mxu0 %v2283
        %2295 = vmatprep.subr.mxu0 0.0
        %2296 = vmatpush1.msra.mxu0 %v2284
        %2297 = vmatprep.subr.mxu0 0.0
        %2298 = vmatpush1.msra.mxu0 %v2285
        %2299 = vmatprep.subr.mxu0 0.0
        %2300 = vmatpush1.msra.mxu0 %v2291
        %2301 = vmatprep.subr.mxu0 0.0
        %2302 = vmatpush1.msra.mxu0 0.0
        %2303 = vmatprep.subr.mxu0 0.0
        %2304 = vmatpush1.msra.mxu0 0.0
        %2305 = vmatprep.subr.mxu0 0.0
        %2306 = vmatpush1.msra.mxu0 0.0
        %2307 = vmatprep.subr.mxu0 0.0
        %2308 = vmatpush1.msra.mxu0 0.0
        %2309 = vmatprep.subr.mxu0 0.0
        %2310 = vmatpush1.msra.mxu0 0.0
        %2311 = vmatprep.subr.mxu0 0.0
        %2312 = vmatpush1.msra.mxu0 0.0
        %2313 = vmatprep.subr.mxu0 0.0
        %2314 = vmatpush1.msra.mxu0 0.0
        %2315 = vmatprep.subr.mxu0 0.0
        %2316 = vmatpush1.msra.mxu0 0.0
        %2317 = vmatprep.subr.mxu0 0.0
        %2318 = vmatpush1.msra.mxu0 0.0
        %2319 = vmatprep.subr.mxu0 0.0
        %2320 = vmatpush1.msra.mxu0 0.0
        %2321 = vmatprep.subr.mxu0 0.0
        %2322 = vmatpush1.msra.mxu0 0.0
        %2323 = vmatprep.subr.mxu0 0.0
        %2324 = vmatpush1.msra.mxu0 0.0
        %2325 = vmatprep.subr.mxu0 0.0
        %2326 = vmatpush1.msra.mxu0 0.0
        %2327 = vmatprep.subr.mxu0 0.0
        %2328 = vmatpush1.msra.mxu0 0.0
        %2329 = vmatprep.subr.mxu0 0.0
        %2330 = vmatpush1.msra.mxu0 0.0
        %2331 = vmatprep.subr.mxu0 0.0
        %2332 = vmatpush1.msra.mxu0 0.0
        %2333 = vmatprep.subr.mxu0 0.0
        %2334 = vmatpush1.msra.mxu0 0.0
        %2335 = vmatprep.subr.mxu0 0.0
        %2336 = vmatpush1.msra.mxu0 0.0
        %2337 = vmatprep.subr.mxu0 0.0
        %2338 = vmatpush1.msra.mxu0 0.0
        %2339 = vmatprep.subr.mxu0 0.0
        %2340 = vmatpush1.msra.mxu0 0.0
        %2341 = vmatprep.subr.mxu0 0.0
        %2342 = vmatpush1.msra.mxu0 0.0
        %2343 = vmatprep.subr.mxu0 0.0
        %2344 = vmatpush1.msra.mxu0 0.0
        %2345 = vmatprep.subr.mxu0 0.0
        %2346 = vmatpush1.msra.mxu0 0.0
        %2347 = vmatprep.subr.mxu0 0.0
        %2348 = vmatpush1.msra.mxu0 0.0
        %2349 = vmatprep.subr.mxu0 0.0
        %2350 = vmatpush1.msra.mxu0 0.0
        %2351 = vmatprep.subr.mxu0 0.0
        %2352 = vmatpush1.msra.mxu0 0.0
        %2353 = vmatprep.subr.mxu0 0.0
        %2354 = vmatpush1.msra.mxu0 0.0
        %2355 = vmatprep.subr.mxu0 0.0
        %2356 = vmatpush1.msra.mxu0 0.0
        %2357 = vmatprep.mubr.f32.mxu0 0.0
        %2358 = vmatmul.mubr.f32.gmra.mrb[0].mxu0 %v2288
        %v2359 = vpop.f32.mrb[0].mxu0
        %v2360 = vadd.f32 0.0, %v2359
        %v2361 = vpop.f32.mrb[0].mxu0
        %2362 = vdwg.mxu0
        %v2363 = vadd.f32 %v2281, %v2360
        %s2364 = scalar_lea.vmem %s4, 192
        %v2365 = vld [vmem:[%s2364] sm:$0xff]
        %v2366 = vld [vmem:[%s2364 + $0x8] sm:$0xff]
        %v2367 = vld [vmem:[%s2364 + $0x10] sm:$0xff]
        %v2368 = vld [vmem:[%s2364 + $0x18] sm:$0x1]
        %v2369 = vrot.slane %v1870, 6
        %v2370 = vsel %vm1884, %v2369, 0
        %v2373 = vsel %vm1887, %v2368, 0
        %2375 = vmatprep.subr.mxu0 0.0
        %2376 = vmatpush1.msra.mxu0 %v2365
        %2377 = vmatprep.subr.mxu0 0.0
        %2378 = vmatpush1.msra.mxu0 %v2366
        %2379 = vmatprep.subr.mxu0 0.0
        %2380 = vmatpush1.msra.mxu0 %v2367
        %2381 = vmatprep.subr.mxu0 0.0
        %2382 = vmatpush1.msra.mxu0 %v2373
        %2383 = vmatprep.subr.mxu0 0.0
        %2384 = vmatpush1.msra.mxu0 0.0
        %2385 = vmatprep.subr.mxu0 0.0
        %2386 = vmatpush1.msra.mxu0 0.0
        %2387 = vmatprep.subr.mxu0 0.0
        %2388 = vmatpush1.msra.mxu0 0.0
        %2389 = vmatprep.subr.mxu0 0.0
        %2390 = vmatpush1.msra.mxu0 0.0
        %2391 = vmatprep.subr.mxu0 0.0
        %2392 = vmatpush1.msra.mxu0 0.0
        %2393 = vmatprep.subr.mxu0 0.0
        %2394 = vmatpush1.msra.mxu0 0.0
        %2395 = vmatprep.subr.mxu0 0.0
        %2396 = vmatpush1.msra.mxu0 0.0
        %2397 = vmatprep.subr.mxu0 0.0
        %2398 = vmatpush1.msra.mxu0 0.0
        %2399 = vmatprep.subr.mxu0 0.0
        %2400 = vmatpush1.msra.mxu0 0.0
        %2401 = vmatprep.subr.mxu0 0.0
        %2402 = vmatpush1.msra.mxu0 0.0
        %2403 = vmatprep.subr.mxu0 0.0
        %2404 = vmatpush1.msra.mxu0 0.0
        %2405 = vmatprep.subr.mxu0 0.0
        %2406 = vmatpush1.msra.mxu0 0.0
        %2407 = vmatprep.subr.mxu0 0.0
        %2408 = vmatpush1.msra.mxu0 0.0
        %2409 = vmatprep.subr.mxu0 0.0
        %2410 = vmatpush1.msra.mxu0 0.0
        %2411 = vmatprep.subr.mxu0 0.0
        %2412 = vmatpush1.msra.mxu0 0.0
        %2413 = vmatprep.subr.mxu0 0.0
        %2414 = vmatpush1.msra.mxu0 0.0
        %2415 = vmatprep.subr.mxu0 0.0
        %2416 = vmatpush1.msra.mxu0 0.0
        %2417 = vmatprep.subr.mxu0 0.0
        %2418 = vmatpush1.msra.mxu0 0.0
        %2419 = vmatprep.subr.mxu0 0.0
        %2420 = vmatpush1.msra.mxu0 0.0
        %2421 = vmatprep.subr.mxu0 0.0
        %2422 = vmatpush1.msra.mxu0 0.0
        %2423 = vmatprep.subr.mxu0 0.0
        %2424 = vmatpush1.msra.mxu0 0.0
        %2425 = vmatprep.subr.mxu0 0.0
        %2426 = vmatpush1.msra.mxu0 0.0
        %2427 = vmatprep.subr.mxu0 0.0
        %2428 = vmatpush1.msra.mxu0 0.0
        %2429 = vmatprep.subr.mxu0 0.0
        %2430 = vmatpush1.msra.mxu0 0.0
        %2431 = vmatprep.subr.mxu0 0.0
        %2432 = vmatpush1.msra.mxu0 0.0
        %2433 = vmatprep.subr.mxu0 0.0
        %2434 = vmatpush1.msra.mxu0 0.0
        %2435 = vmatprep.subr.mxu0 0.0
        %2436 = vmatpush1.msra.mxu0 0.0
        %2437 = vmatprep.subr.mxu0 0.0
        %2438 = vmatpush1.msra.mxu0 0.0
        %2439 = vmatprep.mubr.f32.mxu0 0.0
        %2440 = vmatmul.mubr.f32.gmra.mrb[0].mxu0 %v2370
        %v2441 = vpop.f32.mrb[0].mxu0
        %v2442 = vadd.f32 0.0, %v2441
        %v2443 = vpop.f32.mrb[0].mxu0
        %2444 = vdwg.mxu0
        %v2445 = vadd.f32 %v2363, %v2442
        %s2446 = scalar_lea.vmem %s4, 224
        %v2447 = vld [vmem:[%s2446] sm:$0xff]
        %v2448 = vld [vmem:[%s2446 + $0x8] sm:$0xff]
        %v2449 = vld [vmem:[%s2446 + $0x10] sm:$0xff]
        %v2450 = vld [vmem:[%s2446 + $0x18] sm:$0x1]
        %v2451 = vrot.slane %v1870, 7
        %v2452 = vsel %vm1884, %v2451, 0
        %v2455 = vsel %vm1887, %v2450, 0
        %2457 = vmatprep.subr.mxu0 0.0
        %2458 = vmatpush1.msra.mxu0 %v2447
        %2459 = vmatprep.subr.mxu0 0.0
        %2460 = vmatpush1.msra.mxu0 %v2448
        %2461 = vmatprep.subr.mxu0 0.0
        %2462 = vmatpush1.msra.mxu0 %v2449
        %2463 = vmatprep.subr.mxu0 0.0
        %2464 = vmatpush1.msra.mxu0 %v2455
        %2465 = vmatprep.subr.mxu0 0.0
        %2466 = vmatpush1.msra.mxu0 0.0
        %2467 = vmatprep.subr.mxu0 0.0
        %2468 = vmatpush1.msra.mxu0 0.0
        %2469 = vmatprep.subr.mxu0 0.0
        %2470 = vmatpush1.msra.mxu0 0.0
        %2471 = vmatprep.subr.mxu0 0.0
        %2472 = vmatpush1.msra.mxu0 0.0
        %2473 = vmatprep.subr.mxu0 0.0
        %2474 = vmatpush1.msra.mxu0 0.0
        %2475 = vmatprep.subr.mxu0 0.0
        %2476 = vmatpush1.msra.mxu0 0.0
        %2477 = vmatprep.subr.mxu0 0.0
        %2478 = vmatpush1.msra.mxu0 0.0
        %2479 = vmatprep.subr.mxu0 0.0
        %2480 = vmatpush1.msra.mxu0 0.0
        %2481 = vmatprep.subr.mxu0 0.0
        %2482 = vmatpush1.msra.mxu0 0.0
        %2483 = vmatprep.subr.mxu0 0.0
        %2484 = vmatpush1.msra.mxu0 0.0
        %2485 = vmatprep.subr.mxu0 0.0
        %2486 = vmatpush1.msra.mxu0 0.0
        %2487 = vmatprep.subr.mxu0 0.0
        %2488 = vmatpush1.msra.mxu0 0.0
        %2489 = vmatprep.subr.mxu0 0.0
        %2490 = vmatpush1.msra.mxu0 0.0
        %2491 = vmatprep.subr.mxu0 0.0
        %2492 = vmatpush1.msra.mxu0 0.0
        %2493 = vmatprep.subr.mxu0 0.0
        %2494 = vmatpush1.msra.mxu0 0.0
        %2495 = vmatprep.subr.mxu0 0.0
        %2496 = vmatpush1.msra.mxu0 0.0
        %2497 = vmatprep.subr.mxu0 0.0
        %2498 = vmatpush1.msra.mxu0 0.0
        %2499 = vmatprep.subr.mxu0 0.0
        %2500 = vmatpush1.msra.mxu0 0.0
        %2501 = vmatprep.subr.mxu0 0.0
        %2502 = vmatpush1.msra.mxu0 0.0
        %2503 = vmatprep.subr.mxu0 0.0
        %2504 = vmatpush1.msra.mxu0 0.0
        %2505 = vmatprep.subr.mxu0 0.0
        %2506 = vmatpush1.msra.mxu0 0.0
        %2507 = vmatprep.subr.mxu0 0.0
        %2508 = vmatpush1.msra.mxu0 0.0
        %2509 = vmatprep.subr.mxu0 0.0
        %2510 = vmatpush1.msra.mxu0 0.0
        %2511 = vmatprep.subr.mxu0 0.0
        %2512 = vmatpush1.msra.mxu0 0.0
        %2513 = vmatprep.subr.mxu0 0.0
        %2514 = vmatpush1.msra.mxu0 0.0
        %2515 = vmatprep.subr.mxu0 0.0
        %2516 = vmatpush1.msra.mxu0 0.0
        %2517 = vmatprep.subr.mxu0 0.0
        %2518 = vmatpush1.msra.mxu0 0.0
        %2519 = vmatprep.subr.mxu0 0.0
        %2520 = vmatpush1.msra.mxu0 0.0
        %2521 = vmatprep.mubr.f32.mxu0 0.0
        %2522 = vmatmul.mubr.f32.gmra.mrb[0].mxu0 %v2452
        %v2523 = vpop.f32.mrb[0].mxu0
        %v2524 = vadd.f32 0.0, %v2523
        %v2525 = vpop.f32.mrb[0].mxu0
        %2526 = vdwg.mxu0
        %v2527 = vadd.f32 %v2445, %v2524
        %vm2528 = vcmask 73728
        %2529 = vst.msk [vmem:[%s216] sm:$0x1] %vm2528, %v2527
        %s2530 = sand.u32 %s137, 1
        %s2531 = scalar_lea.sflag [#allocation3], %s2530
        %s2532 = sand.u32 %s137, 1
        %s2533 = scalar_lea.vmem [#allocation2], %s2532
        // Predicated region
        $region41: #{cnn_forward.1} parent=39 // pred_check
          %p2534 = pneg %p147
        $region42: #{cnn_forward.1} parent=39 // pred_check_branch
          %2536 = sbr.rel (%p2534) target = $region44
        $region43: #{cnn_forward.1} parent=39 // pred_region
          %s2538 = ssub.s32 16, 16
          %2539 = vsyncadd %s2531, %s2538
          %s2540 = smul.addr %s19, 16
          %s2541 = scalar_lea.hbm %s5, %s2540
          %s2543 = sshll.u32 %s2533, 4
          %s2544 = int_to_ptr.vmem [resolvable:$true] %s2543
          %2546 = dma.vmem_to_hbm [thread:$0]  %s2544, 16, %s2541, %s2531
        $region44: #{cnn_forward.1} parent=39 // pred_fallthru
          _
      $region40: #{cnn_forward.1} parent=5 // pred_fallthru
        _
      %p2547 = scmp.le.s32.totalorder 2, %s14
      // Predicated region
      $region45: #{cnn_forward.1} parent=5 // pred_check
        %p2548 = pneg %p2547
      $region46: #{cnn_forward.1} parent=5 // pred_check_branch
        %2550 = sbr.rel (%p2548) target = $region48
      $region47: #{cnn_forward.1} parent=5 // pred_region
        %s2551 = ssub.s32 %s14, 2
        // Predicated region
        $region49: #{cnn_forward.1} parent=47 // pred_check
          %p2552 = pneg %p153
        $region50: #{cnn_forward.1} parent=47 // pred_check_branch
          %2554 = sbr.rel (%p2552) target = $region52
        $region51: #{cnn_forward.1} parent=47 // pred_region
          %s2555 = sand.u32 %s138, 1
          %s2556 = scalar_lea.sflag [#allocation3], %s2555
          %s2557 = sand.u32 %s138, 1
          %s2558 = scalar_lea.vmem [#allocation2], %s2557
          %2559 = dma.done %s2556, 16
        $region52: #{cnn_forward.1} parent=47 // pred_fallthru
          _
      $region48: #{cnn_forward.1} parent=5 // pred_fallthru
        _
    $region6: #{cnn_forward.1} parent=1 // loop_footer
      %s18 = sadd.s32 1, %s14
    $region7: #{cnn_forward.1} parent=1 // loop_footer_branch
      %13 = sbr.rel target = $region3
    $region8: #{cnn_forward.1} parent=1 // loop_exit
      _
    %2560 = vsyncpa [#allocation3], 1
    %s2561 = scalar_lea.sflag [#allocation3], 1
    %2562 = vsyncpa %s2561, 1

</llo_original>
